<compile_context>
chip_gen: v6e
topology: v6e:2x2x1
jax: 0.10.0
libtpu: 0.0.40
codegen_flags: <defaults>
</compile_context>

<pallas_src>
import jax
import jax.numpy as jnp
from jax.experimental import pallas as pl
from jax.experimental.pallas import tpu as pltpu

HIDDEN_DIM = 64
NUM_LAYERS = 2
CNN_OUT = 32
CNN_K = 3


# --------------------------------------------------------------------------
# Fused kernel: LSTM layer 1 + LSTM layer 2 + folded (conv ∘ mean-pool ∘ fc).
# --------------------------------------------------------------------------
def _fused_kernel(x_ref, wih1_ref, whh1_ref, b1_ref,
                  w2_ref, b2_ref, whead_ref, beff_ref, out_ref):
    B, T, D = x_ref.shape
    H = whh1_ref.shape[0]

    # ---- hoisted layer-1 input projection (bf16 MXU, f32 accumulate) ------
    # b1 is folded in here once, so the recurrence only adds the h@W_hh term.
    x = x_ref[...]                                              # (B, T, D) bf16
    gx1 = jnp.dot(x.reshape(B * T, D), wih1_ref[...],
                  preferred_element_type=jnp.float32)
    gx1 = (gx1 + b1_ref[...]).reshape(B, T, 4 * H)              # (B, T, 4H) f32

    b2 = b2_ref[...]                                            # (1, 4H) f32
    w_head = whead_ref[...]                                     # (T, H)  f32

    h1 = jnp.zeros((B, H), jnp.float32)
    c1 = jnp.zeros((B, H), jnp.float32)
    h2 = jnp.zeros((B, H), jnp.float32)
    c2 = jnp.zeros((B, H), jnp.float32)
    acc = jnp.zeros((B, H), jnp.float32)   # folded conv+pool+fc accumulator

    def lstm_step(gates, c_prev):
        # Gate columns are [i | f | g | o] with the g block pre-scaled by 2,
        # so one full-width sigmoid covers all gates (tanh(g) = 2*sigmoid(2g)-1).
        s = jax.nn.sigmoid(gates)
        i = s[:, 0:H]
        f = s[:, H:2 * H]
        g = 2.0 * s[:, 2 * H:3 * H] - 1.0
        o = s[:, 3 * H:4 * H]
        c = f * c_prev + i * g
        h = o * jnp.tanh(c)
        return h, c

    for t in range(T):                                          # static unroll
        # ---- layer 1 (h1 == 0 at t == 0: skip the recurrent matmul) -------
        g1 = gx1[:, t, :]
        if t > 0:
            g1 = g1 + jnp.dot(h1.astype(jnp.bfloat16), whh1_ref[...],
                              preferred_element_type=jnp.float32)
        h1, c1 = lstm_step(g1, c1)

        # ---- layer 2: single 2H-contraction matmul [h1|h2] @ [Wih2;Whh2] --
        lhs2 = jnp.concatenate([h1, h2], axis=-1).astype(jnp.bfloat16)
        g2 = jnp.dot(lhs2, w2_ref[...],
                     preferred_element_type=jnp.float32) + b2
        h2, c2 = lstm_step(g2, c2)

        # ---- folded head: conv(k=3) + mean-pool + fc as one per-step FMA --
        acc = acc + h2 * w_head[t:t + 1, :]

    out = jnp.sum(acc, axis=-1, keepdims=True) + beff_ref[...]
    out_ref[...] = out.astype(out_ref.dtype)


def _pick_batch_tile(B):
    for tb in (512, 256, 128, 64, 32, 16, 8):
        if B % tb == 0:
            return tb
    return B


def _fused_forward_call(x, kp):
    B, T, D = x.shape
    H = kp["whh1"].shape[0]
    tb = _pick_batch_tile(B)
    grid = (B // tb,)

    flops = 2 * B * T * (D * 4 * H + H * 4 * H + 2 * H * 4 * H) + 4 * B * T * H
    transcendentals = B * T * (2 * 4 * H + 2 * H)
    bytes_accessed = (x.size * x.dtype.itemsize
                      + sum(int(v.size) * v.dtype.itemsize for v in kp.values())
                      + B * 4)

    return pl.pallas_call(
        _fused_kernel,
        out_shape=jax.ShapeDtypeStruct((B, 1), jnp.float32),
        grid_spec=pltpu.PrefetchScalarGridSpec(
            num_scalar_prefetch=0,
            grid=grid,
            in_specs=[
                pl.BlockSpec((tb, T, D), lambda i: (i, 0, 0)),     # x (bf16)
                pl.BlockSpec((D, 4 * H), lambda i: (0, 0)),        # W_ih1^T (bf16)
                pl.BlockSpec((H, 4 * H), lambda i: (0, 0)),        # W_hh1^T (bf16)
                pl.BlockSpec((1, 4 * H), lambda i: (0, 0)),        # b1 (f32)
                pl.BlockSpec((2 * H, 4 * H), lambda i: (0, 0)),    # [Wih2;Whh2]^T (bf16)
                pl.BlockSpec((1, 4 * H), lambda i: (0, 0)),        # b2 (f32)
                pl.BlockSpec((T, H), lambda i: (0, 0)),            # w_head (f32)
                pl.BlockSpec((1, 1), lambda i: (0, 0)),            # b_eff (f32)
            ],
            out_specs=pl.BlockSpec((tb, 1), lambda i: (i, 0)),
        ),
        compiler_params=pltpu.CompilerParams(
            dimension_semantics=("parallel",)),
        cost_estimate=pl.CostEstimate(
            flops=flops, transcendentals=transcendentals,
            bytes_accessed=bytes_accessed),
    )(x, kp["wih1"], kp["whh1"], kp["b1"],
      kp["w2"], kp["b2"], kp["w_head"], kp["b_eff"])


@jax.jit
def lstm_cnn_forward(x, kparams):
    """x: (B, T, D) float32 (batch_first, like PyTorch) -> (B, 1) float32."""
    # Cast the activations to bf16 once at the boundary (MXU LHS dtype).
    return _fused_forward_call(x.astype(jnp.bfloat16), kparams)


# --------------------------------------------------------------------------
# Parameter construction (PyTorch-layout) and one-time kernel-layout prep.
# --------------------------------------------------------------------------
def init_params(key, input_dim, hidden_dim=HIDDEN_DIM, num_layers=NUM_LAYERS,
                cnn_out=CNN_OUT, cnn_k=CNN_K):
    params = {"lstm": [], "conv": None, "fc": None}
    k_lstm = 1.0 / jnp.sqrt(hidden_dim)
    for layer in range(num_layers):
        d_in = input_dim if layer == 0 else hidden_dim
        key, k1, k2, k3, k4 = jax.random.split(key, 5)
        wih = jax.random.uniform(k1, (4 * hidden_dim, d_in), jnp.float32, -k_lstm, k_lstm)
        whh = jax.random.uniform(k2, (4 * hidden_dim, hidden_dim), jnp.float32, -k_lstm, k_lstm)
        bih = jax.random.uniform(k3, (4 * hidden_dim,), jnp.float32, -k_lstm, k_lstm)
        bhh = jax.random.uniform(k4, (4 * hidden_dim,), jnp.float32, -k_lstm, k_lstm)
        params["lstm"].append((wih, whh, bih, bhh))
    key, k1, k2, k3, k4 = jax.random.split(key, 5)
    k_conv = 1.0 / jnp.sqrt(hidden_dim * cnn_k)
    w_conv = jax.random.uniform(k1, (cnn_out, hidden_dim, cnn_k), jnp.float32, -k_conv, k_conv)
    b_conv = jax.random.uniform(k2, (cnn_out,), jnp.float32, -k_conv, k_conv)
    k_fc = 1.0 / jnp.sqrt(cnn_out)
    w_fc = jax.random.uniform(k3, (1, cnn_out), jnp.float32, -k_fc, k_fc)
    b_fc = jax.random.uniform(k4, (1,), jnp.float32, -k_fc, k_fc)
    params["conv"] = (w_conv, b_conv)
    params["fc"] = (w_fc, b_fc)
    return params


def prepare_kernel_params(params, seq_len):
    """One-time transform of PyTorch-layout params into kernel layout.

    - transposes W_ih/W_hh to (in, 4H), merges biases, pre-scales g-gate
      columns by 2 (tanh-via-sigmoid trick), casts matmul weights to bf16,
    - concatenates layer-2's W_ih^T / W_hh^T into one (2H, 4H) matrix,
    - folds conv(k=3) + mean-pool + fc into a per-timestep head vector:
        out = b_eff + sum_t h2_t . w_head[t],
        w_head[t] = (1/L) * sum_{k: 0<=t-k<=L-1} w_eff[k],
        w_eff[k,c] = sum_o W_conv[o,c,k] * W_fc[0,o],  L = T - K + 1.
    Called once, outside jit — no per-call weight transforms remain.
    """
    (wih1, whh1, bih1, bhh1), (wih2, whh2, bih2, bhh2) = params["lstm"]
    w_conv, b_conv = params["conv"]
    w_fc, b_fc = params["fc"]
    H = whh1.shape[1]
    K = w_conv.shape[-1]
    T = seq_len
    L = T - K + 1

    scale = jnp.concatenate([
        jnp.ones((2 * H,), jnp.float32),        # i, f
        jnp.full((H,), 2.0, jnp.float32),       # g (doubled for tanh-via-sigmoid)
        jnp.ones((H,), jnp.float32),            # o
    ])

    def prep(wih, whh, bih, bhh):
        wih_t = (jnp.transpose(wih) * scale[None, :]).astype(jnp.bfloat16)
        whh_t = (jnp.transpose(whh) * scale[None, :]).astype(jnp.bfloat16)
        b = ((bih + bhh) * scale)[None, :].astype(jnp.float32)
        return wih_t, whh_t, b

    wih1_t, whh1_t, b1 = prep(wih1, whh1, bih1, bhh1)
    wih2_t, whh2_t, b2 = prep(wih2, whh2, bih2, bhh2)
    w2 = jnp.concatenate([wih2_t, whh2_t], axis=0)             # (2H, 4H) bf16

    w_eff = jnp.einsum("ock,o->kc", w_conv, w_fc[0])           # (K, H) f32
    rows = []
    for t in range(T):
        v = jnp.zeros((H,), jnp.float32)
        for k in range(K):
            if 0 <= t - k <= L - 1:
                v = v + w_eff[k]
        rows.append(v / L)
    w_head = jnp.stack(rows, axis=0).astype(jnp.float32)       # (T, H)
    b_eff = (jnp.dot(b_conv, w_fc[0]) + b_fc[0]).reshape(1, 1).astype(jnp.float32)

    return {
        "wih1": wih1_t, "whh1": whh1_t, "b1": b1,
        "w2": w2, "b2": b2,
        "w_head": w_head, "b_eff": b_eff,
    }


# --------------------------------------------------------------------------
# Plain-JAX reference (PyTorch semantics) for correctness check.
# --------------------------------------------------------------------------
def reference_forward(x, params):
    with jax.default_matmul_precision("highest"):
        B, T, _ = x.shape
        h_seq = x
        for (wih, whh, bih, bhh) in params["lstm"]:
            H = whh.shape[1]
            h = jnp.zeros((B, H), jnp.float32)
            c = jnp.zeros((B, H), jnp.float32)
            outs = []
            for t in range(T):
                gates = h_seq[:, t] @ wih.T + bih + h @ whh.T + bhh
                i = jax.nn.sigmoid(gates[:, :H])
                f = jax.nn.sigmoid(gates[:, H:2 * H])
                g = jnp.tanh(gates[:, 2 * H:3 * H])
                o = jax.nn.sigmoid(gates[:, 3 * H:])
                c = f * c + i * g
                h = o * jnp.tanh(c)
                outs.append(h)
            h_seq = jnp.stack(outs, axis=1)                    # (B, T, H)
        w_conv, b_conv = params["conv"]
        w_fc, b_fc = params["fc"]
        cnn_in = jnp.transpose(h_seq, (0, 2, 1))               # (B, H, T)
        K = w_conv.shape[-1]
        L_out = T - K + 1
        conv_out = b_conv[None, :, None]
        conv_out = conv_out + sum(
            jnp.einsum("bcl,oc->bol", cnn_in[:, :, k:k + L_out], w_conv[:, :, k])
            for k in range(K)
        )
        pooled = conv_out.mean(-1)                             # (B, O)
        return pooled @ w_fc.T + b_fc                          # (B, 1)


if __name__ == "__main__":
    B, T, D = 2, 8, 16
    key = jax.random.PRNGKey(0)
    kx, kp = jax.random.split(key)
    x = jax.random.normal(kx, (B, T, D), jnp.float32)
    params = init_params(kp, input_dim=D)
    kparams = prepare_kernel_params(params, seq_len=T)   # one-time, outside jit

    out = lstm_cnn_forward(x, kparams)
    out = jax.block_until_ready(out)

    ref = reference_forward(x, params)
    assert out.shape == (B, 1), out.shape
    # bf16 MXU operands (weights + matmul LHS) vs an f32 "highest" reference:
    # keep a relaxed tolerance; state/gates/head accumulation stay f32.
    assert jnp.allclose(out, ref, atol=5e-2, rtol=5e-2), (out, ref)

    # TODO(synk): training-mode dropout between LSTM layers is not implemented
    # (eval-mode identity only).
    print("KERNEL_OK")
</pallas_src>

<mosaic_0001>
module attributes {stable_mosaic.version = 11 : i64} {
  func.func @_fused_kernel(%arg0: i32, %arg1: memref<2x8x16xbf16, #tpu.memory_space<vmem>>, %arg2: memref<16x256xbf16, #tpu.memory_space<vmem>>, %arg3: memref<64x256xbf16, #tpu.memory_space<vmem>>, %arg4: memref<1x256xf32, #tpu.memory_space<vmem>>, %arg5: memref<128x256xbf16, #tpu.memory_space<vmem>>, %arg6: memref<1x256xf32, #tpu.memory_space<vmem>>, %arg7: memref<8x64xf32, #tpu.memory_space<vmem>>, %arg8: memref<1x1xf32, #tpu.memory_space<vmem>>, %arg9: memref<2x1xf32, #tpu.memory_space<vmem>>) attributes {dimension_semantics = [#tpu.dimension_semantics<parallel>], iteration_bounds = array<i64: 1>, scalar_prefetch = 0 : i64, scratch_operands = 0 : i64, tpu.core_type = #tpu.core_type<tc>, window_params = [{transform_indices = @transform_0, window_bounds = array<i64: 2, 8, 16>}, {pipeline_mode = #tpu.pipeline_mode<synchronous>, transform_indices = @transform_1, window_bounds = array<i64: 16, 256>}, {pipeline_mode = #tpu.pipeline_mode<synchronous>, transform_indices = @transform_2, window_bounds = array<i64: 64, 256>}, {pipeline_mode = #tpu.pipeline_mode<synchronous>, transform_indices = @transform_3, window_bounds = array<i64: 1, 256>}, {pipeline_mode = #tpu.pipeline_mode<synchronous>, transform_indices = @transform_4, window_bounds = array<i64: 128, 256>}, {pipeline_mode = #tpu.pipeline_mode<synchronous>, transform_indices = @transform_5, window_bounds = array<i64: 1, 256>}, {pipeline_mode = #tpu.pipeline_mode<synchronous>, transform_indices = @transform_6, window_bounds = array<i64: 8, 64>}, {pipeline_mode = #tpu.pipeline_mode<synchronous>, transform_indices = @transform_7, window_bounds = array<i64: 1, 1>}, {transform_indices = @transform_8, window_bounds = array<i64: 2, 1>}]} {
    %c0 = arith.constant 0 : index
    %c0_0 = arith.constant 0 : index
    %c0_1 = arith.constant 0 : index
    %0 = vector.load %arg1[%c0, %c0_0, %c0_1] : memref<2x8x16xbf16, #tpu.memory_space<vmem>>, vector<2x8x16xbf16>
    %1 = vector.shape_cast %0 : vector<2x8x16xbf16> to vector<16x16xbf16>
    %c0_2 = arith.constant 0 : index
    %c0_3 = arith.constant 0 : index
    %2 = vector.load %arg2[%c0_2, %c0_3] : memref<16x256xbf16, #tpu.memory_space<vmem>>, vector<16x256xbf16>
    %cst = arith.constant dense<0.000000e+00> : vector<16x256xf32>
    %3 = tpu.matmul %1, %2, %cst {dimension_numbers = #tpu.dot_dimension_numbers<[1], [0], [0], [1], [0, 0, 1, 1], [], []>} : vector<16x16xbf16>, vector<16x256xbf16>, vector<16x256xf32> -> vector<16x256xf32>
    %c0_4 = arith.constant 0 : index
    %c0_5 = arith.constant 0 : index
    %4 = vector.load %arg4[%c0_4, %c0_5] : memref<1x256xf32, #tpu.memory_space<vmem>>, vector<1x256xf32>
    %5 = vector.broadcast %4 : vector<1x256xf32> to vector<16x256xf32>
    %6 = arith.addf %3, %5 : vector<16x256xf32>
    %7 = vector.shape_cast %6 : vector<16x256xf32> to vector<2x8x256xf32>
    %c0_6 = arith.constant 0 : index
    %c0_7 = arith.constant 0 : index
    %8 = vector.load %arg6[%c0_6, %c0_7] : memref<1x256xf32, #tpu.memory_space<vmem>>, vector<1x256xf32>
    %c0_8 = arith.constant 0 : index
    %c0_9 = arith.constant 0 : index
    %9 = vector.load %arg7[%c0_8, %c0_9] : memref<8x64xf32, #tpu.memory_space<vmem>>, vector<8x64xf32>
    %cst_10 = arith.constant 0.000000e+00 : f32
    %10 = vector.broadcast %cst_10 : f32 to vector<2x64xf32>
    %cst_11 = arith.constant 0.000000e+00 : f32
    %11 = vector.broadcast %cst_11 : f32 to vector<2x64xf32>
    %cst_12 = arith.constant 0.000000e+00 : f32
    %12 = vector.broadcast %cst_12 : f32 to vector<2x64xf32>
    %cst_13 = arith.constant 0.000000e+00 : f32
    %13 = vector.broadcast %cst_13 : f32 to vector<2x64xf32>
    %14 = vector.extract_strided_slice %7 {offsets = [0, 0, 0], sizes = [2, 1, 256], strides = [1, 1, 1]} : vector<2x8x256xf32> to vector<2x1x256xf32>
    %15 = vector.shape_cast %14 : vector<2x1x256xf32> to vector<2x256xf32>
    %16 = arith.negf %15 : vector<2x256xf32>
    %17 = math.exp %16 : vector<2x256xf32>
    %cst_14 = arith.constant 1.000000e+00 : f32
    %18 = vector.broadcast %cst_14 : f32 to vector<2x256xf32>
    %19 = arith.addf %18, %17 : vector<2x256xf32>
    %20 = arith.divf %18, %19 : vector<2x256xf32>
    %21 = vector.extract_strided_slice %20 {offsets = [0, 0], sizes = [2, 64], strides = [1, 1]} : vector<2x256xf32> to vector<2x64xf32>
    %22 = vector.extract_strided_slice %20 {offsets = [0, 64], sizes = [2, 64], strides = [1, 1]} : vector<2x256xf32> to vector<2x64xf32>
    %23 = vector.extract_strided_slice %20 {offsets = [0, 128], sizes = [2, 64], strides = [1, 1]} : vector<2x256xf32> to vector<2x64xf32>
    %cst_15 = arith.constant 2.000000e+00 : f32
    %24 = vector.broadcast %cst_15 : f32 to vector<2x64xf32>
    %25 = arith.mulf %24, %23 : vector<2x64xf32>
    %cst_16 = arith.constant 1.000000e+00 : f32
    %26 = vector.broadcast %cst_16 : f32 to vector<2x64xf32>
    %27 = arith.subf %25, %26 : vector<2x64xf32>
    %28 = vector.extract_strided_slice %20 {offsets = [0, 192], sizes = [2, 64], strides = [1, 1]} : vector<2x256xf32> to vector<2x64xf32>
    %29 = arith.mulf %22, %10 : vector<2x64xf32>
    %30 = arith.mulf %21, %27 : vector<2x64xf32>
    %31 = arith.addf %29, %30 : vector<2x64xf32>
    %32 = math.tanh %31 : vector<2x64xf32>
    %33 = arith.mulf %28, %32 : vector<2x64xf32>
    %34 = tpu.concatenate %33, %11 in 1 : vector<2x64xf32>, vector<2x64xf32> -> vector<2x128xf32>
    %35 = arith.truncf %34 : vector<2x128xf32> to vector<2x128xbf16>
    %c0_17 = arith.constant 0 : index
    %c0_18 = arith.constant 0 : index
    %36 = vector.load %arg5[%c0_17, %c0_18] : memref<128x256xbf16, #tpu.memory_space<vmem>>, vector<128x256xbf16>
    %cst_19 = arith.constant dense<0.000000e+00> : vector<2x256xf32>
    %37 = tpu.matmul %35, %36, %cst_19 {dimension_numbers = #tpu.dot_dimension_numbers<[1], [0], [0], [1], [0, 0, 1, 1], [], []>} : vector<2x128xbf16>, vector<128x256xbf16>, vector<2x256xf32> -> vector<2x256xf32>
    %38 = vector.broadcast %8 : vector<1x256xf32> to vector<2x256xf32>
    %39 = arith.addf %37, %38 : vector<2x256xf32>
    %40 = arith.negf %39 : vector<2x256xf32>
    %41 = math.exp %40 : vector<2x256xf32>
    %cst_20 = arith.constant 1.000000e+00 : f32
    %42 = vector.broadcast %cst_20 : f32 to vector<2x256xf32>
    %43 = arith.addf %42, %41 : vector<2x256xf32>
    %44 = arith.divf %42, %43 : vector<2x256xf32>
    %45 = vector.extract_strided_slice %44 {offsets = [0, 0], sizes = [2, 64], strides = [1, 1]} : vector<2x256xf32> to vector<2x64xf32>
    %46 = vector.extract_strided_slice %44 {offsets = [0, 64], sizes = [2, 64], strides = [1, 1]} : vector<2x256xf32> to vector<2x64xf32>
    %47 = vector.extract_strided_slice %44 {offsets = [0, 128], sizes = [2, 64], strides = [1, 1]} : vector<2x256xf32> to vector<2x64xf32>
    %cst_21 = arith.constant 2.000000e+00 : f32
    %48 = vector.broadcast %cst_21 : f32 to vector<2x64xf32>
    %49 = arith.mulf %48, %47 : vector<2x64xf32>
    %cst_22 = arith.constant 1.000000e+00 : f32
    %50 = vector.broadcast %cst_22 : f32 to vector<2x64xf32>
    %51 = arith.subf %49, %50 : vector<2x64xf32>
    %52 = vector.extract_strided_slice %44 {offsets = [0, 192], sizes = [2, 64], strides = [1, 1]} : vector<2x256xf32> to vector<2x64xf32>
    %53 = arith.mulf %46, %12 : vector<2x64xf32>
    %54 = arith.mulf %45, %51 : vector<2x64xf32>
    %55 = arith.addf %53, %54 : vector<2x64xf32>
    %56 = math.tanh %55 : vector<2x64xf32>
    %57 = arith.mulf %52, %56 : vector<2x64xf32>
    %58 = vector.extract_strided_slice %9 {offsets = [0, 0], sizes = [1, 64], strides = [1, 1]} : vector<8x64xf32> to vector<1x64xf32>
    %59 = vector.broadcast %58 : vector<1x64xf32> to vector<2x64xf32>
    %60 = arith.mulf %57, %59 : vector<2x64xf32>
    %61 = arith.addf %13, %60 : vector<2x64xf32>
    %62 = vector.extract_strided_slice %7 {offsets = [0, 1, 0], sizes = [2, 1, 256], strides = [1, 1, 1]} : vector<2x8x256xf32> to vector<2x1x256xf32>
    %63 = vector.shape_cast %62 : vector<2x1x256xf32> to vector<2x256xf32>
    %64 = arith.truncf %33 : vector<2x64xf32> to vector<2x64xbf16>
    %c0_23 = arith.constant 0 : index
    %c0_24 = arith.constant 0 : index
    %65 = vector.load %arg3[%c0_23, %c0_24] : memref<64x256xbf16, #tpu.memory_space<vmem>>, vector<64x256xbf16>
    %cst_25 = arith.constant dense<0.000000e+00> : vector<2x256xf32>
    %66 = tpu.matmul %64, %65, %cst_25 {dimension_numbers = #tpu.dot_dimension_numbers<[1], [0], [0], [1], [0, 0, 1, 1], [], []>} : vector<2x64xbf16>, vector<64x256xbf16>, vector<2x256xf32> -> vector<2x256xf32>
    %67 = arith.addf %63, %66 : vector<2x256xf32>
    %68 = arith.negf %67 : vector<2x256xf32>
    %69 = math.exp %68 : vector<2x256xf32>
    %cst_26 = arith.constant 1.000000e+00 : f32
    %70 = vector.broadcast %cst_26 : f32 to vector<2x256xf32>
    %71 = arith.addf %70, %69 : vector<2x256xf32>
    %72 = arith.divf %70, %71 : vector<2x256xf32>
    %73 = vector.extract_strided_slice %72 {offsets = [0, 0], sizes = [2, 64], strides = [1, 1]} : vector<2x256xf32> to vector<2x64xf32>
    %74 = vector.extract_strided_slice %72 {offsets = [0, 64], sizes = [2, 64], strides = [1, 1]} : vector<2x256xf32> to vector<2x64xf32>
    %75 = vector.extract_strided_slice %72 {offsets = [0, 128], sizes = [2, 64], strides = [1, 1]} : vector<2x256xf32> to vector<2x64xf32>
    %cst_27 = arith.constant 2.000000e+00 : f32
    %76 = vector.broadcast %cst_27 : f32 to vector<2x64xf32>
    %77 = arith.mulf %76, %75 : vector<2x64xf32>
    %cst_28 = arith.constant 1.000000e+00 : f32
    %78 = vector.broadcast %cst_28 : f32 to vector<2x64xf32>
    %79 = arith.subf %77, %78 : vector<2x64xf32>
    %80 = vector.extract_strided_slice %72 {offsets = [0, 192], sizes = [2, 64], strides = [1, 1]} : vector<2x256xf32> to vector<2x64xf32>
    %81 = arith.mulf %74, %31 : vector<2x64xf32>
    %82 = arith.mulf %73, %79 : vector<2x64xf32>
    %83 = arith.addf %81, %82 : vector<2x64xf32>
    %84 = math.tanh %83 : vector<2x64xf32>
    %85 = arith.mulf %80, %84 : vector<2x64xf32>
    %86 = tpu.concatenate %85, %57 in 1 : vector<2x64xf32>, vector<2x64xf32> -> vector<2x128xf32>
    %87 = arith.truncf %86 : vector<2x128xf32> to vector<2x128xbf16>
    %c0_29 = arith.constant 0 : index
    %c0_30 = arith.constant 0 : index
    %88 = vector.load %arg5[%c0_29, %c0_30] : memref<128x256xbf16, #tpu.memory_space<vmem>>, vector<128x256xbf16>
    %cst_31 = arith.constant dense<0.000000e+00> : vector<2x256xf32>
    %89 = tpu.matmul %87, %88, %cst_31 {dimension_numbers = #tpu.dot_dimension_numbers<[1], [0], [0], [1], [0, 0, 1, 1], [], []>} : vector<2x128xbf16>, vector<128x256xbf16>, vector<2x256xf32> -> vector<2x256xf32>
    %90 = vector.broadcast %8 : vector<1x256xf32> to vector<2x256xf32>
    %91 = arith.addf %89, %90 : vector<2x256xf32>
    %92 = arith.negf %91 : vector<2x256xf32>
    %93 = math.exp %92 : vector<2x256xf32>
    %cst_32 = arith.constant 1.000000e+00 : f32
    %94 = vector.broadcast %cst_32 : f32 to vector<2x256xf32>
    %95 = arith.addf %94, %93 : vector<2x256xf32>
    %96 = arith.divf %94, %95 : vector<2x256xf32>
    %97 = vector.extract_strided_slice %96 {offsets = [0, 0], sizes = [2, 64], strides = [1, 1]} : vector<2x256xf32> to vector<2x64xf32>
    %98 = vector.extract_strided_slice %96 {offsets = [0, 64], sizes = [2, 64], strides = [1, 1]} : vector<2x256xf32> to vector<2x64xf32>
    %99 = vector.extract_strided_slice %96 {offsets = [0, 128], sizes = [2, 64], strides = [1, 1]} : vector<2x256xf32> to vector<2x64xf32>
    %cst_33 = arith.constant 2.000000e+00 : f32
    %100 = vector.broadcast %cst_33 : f32 to vector<2x64xf32>
    %101 = arith.mulf %100, %99 : vector<2x64xf32>
    %cst_34 = arith.constant 1.000000e+00 : f32
    %102 = vector.broadcast %cst_34 : f32 to vector<2x64xf32>
    %103 = arith.subf %101, %102 : vector<2x64xf32>
    %104 = vector.extract_strided_slice %96 {offsets = [0, 192], sizes = [2, 64], strides = [1, 1]} : vector<2x256xf32> to vector<2x64xf32>
    %105 = arith.mulf %98, %55 : vector<2x64xf32>
    %106 = arith.mulf %97, %103 : vector<2x64xf32>
    %107 = arith.addf %105, %106 : vector<2x64xf32>
    %108 = math.tanh %107 : vector<2x64xf32>
    %109 = arith.mulf %104, %108 : vector<2x64xf32>
    %110 = vector.extract_strided_slice %9 {offsets = [1, 0], sizes = [1, 64], strides = [1, 1]} : vector<8x64xf32> to vector<1x64xf32>
    %111 = vector.broadcast %110 : vector<1x64xf32> to vector<2x64xf32>
    %112 = arith.mulf %109, %111 : vector<2x64xf32>
    %113 = arith.addf %61, %112 : vector<2x64xf32>
    %114 = vector.extract_strided_slice %7 {offsets = [0, 2, 0], sizes = [2, 1, 256], strides = [1, 1, 1]} : vector<2x8x256xf32> to vector<2x1x256xf32>
    %115 = vector.shape_cast %114 : vector<2x1x256xf32> to vector<2x256xf32>
    %116 = arith.truncf %85 : vector<2x64xf32> to vector<2x64xbf16>
    %c0_35 = arith.constant 0 : index
    %c0_36 = arith.constant 0 : index
    %117 = vector.load %arg3[%c0_35, %c0_36] : memref<64x256xbf16, #tpu.memory_space<vmem>>, vector<64x256xbf16>
    %cst_37 = arith.constant dense<0.000000e+00> : vector<2x256xf32>
    %118 = tpu.matmul %116, %117, %cst_37 {dimension_numbers = #tpu.dot_dimension_numbers<[1], [0], [0], [1], [0, 0, 1, 1], [], []>} : vector<2x64xbf16>, vector<64x256xbf16>, vector<2x256xf32> -> vector<2x256xf32>
    %119 = arith.addf %115, %118 : vector<2x256xf32>
    %120 = arith.negf %119 : vector<2x256xf32>
    %121 = math.exp %120 : vector<2x256xf32>
    %cst_38 = arith.constant 1.000000e+00 : f32
    %122 = vector.broadcast %cst_38 : f32 to vector<2x256xf32>
    %123 = arith.addf %122, %121 : vector<2x256xf32>
    %124 = arith.divf %122, %123 : vector<2x256xf32>
    %125 = vector.extract_strided_slice %124 {offsets = [0, 0], sizes = [2, 64], strides = [1, 1]} : vector<2x256xf32> to vector<2x64xf32>
    %126 = vector.extract_strided_slice %124 {offsets = [0, 64], sizes = [2, 64], strides = [1, 1]} : vector<2x256xf32> to vector<2x64xf32>
    %127 = vector.extract_strided_slice %124 {offsets = [0, 128], sizes = [2, 64], strides = [1, 1]} : vector<2x256xf32> to vector<2x64xf32>
    %cst_39 = arith.constant 2.000000e+00 : f32
    %128 = vector.broadcast %cst_39 : f32 to vector<2x64xf32>
    %129 = arith.mulf %128, %127 : vector<2x64xf32>
    %cst_40 = arith.constant 1.000000e+00 : f32
    %130 = vector.broadcast %cst_40 : f32 to vector<2x64xf32>
    %131 = arith.subf %129, %130 : vector<2x64xf32>
    %132 = vector.extract_strided_slice %124 {offsets = [0, 192], sizes = [2, 64], strides = [1, 1]} : vector<2x256xf32> to vector<2x64xf32>
    %133 = arith.mulf %126, %83 : vector<2x64xf32>
    %134 = arith.mulf %125, %131 : vector<2x64xf32>
    %135 = arith.addf %133, %134 : vector<2x64xf32>
    %136 = math.tanh %135 : vector<2x64xf32>
    %137 = arith.mulf %132, %136 : vector<2x64xf32>
    %138 = tpu.concatenate %137, %109 in 1 : vector<2x64xf32>, vector<2x64xf32> -> vector<2x128xf32>
    %139 = arith.truncf %138 : vector<2x128xf32> to vector<2x128xbf16>
    %c0_41 = arith.constant 0 : index
    %c0_42 = arith.constant 0 : index
    %140 = vector.load %arg5[%c0_41, %c0_42] : memref<128x256xbf16, #tpu.memory_space<vmem>>, vector<128x256xbf16>
    %cst_43 = arith.constant dense<0.000000e+00> : vector<2x256xf32>
    %141 = tpu.matmul %139, %140, %cst_43 {dimension_numbers = #tpu.dot_dimension_numbers<[1], [0], [0], [1], [0, 0, 1, 1], [], []>} : vector<2x128xbf16>, vector<128x256xbf16>, vector<2x256xf32> -> vector<2x256xf32>
    %142 = vector.broadcast %8 : vector<1x256xf32> to vector<2x256xf32>
    %143 = arith.addf %141, %142 : vector<2x256xf32>
    %144 = arith.negf %143 : vector<2x256xf32>
    %145 = math.exp %144 : vector<2x256xf32>
    %cst_44 = arith.constant 1.000000e+00 : f32
    %146 = vector.broadcast %cst_44 : f32 to vector<2x256xf32>
    %147 = arith.addf %146, %145 : vector<2x256xf32>
    %148 = arith.divf %146, %147 : vector<2x256xf32>
    %149 = vector.extract_strided_slice %148 {offsets = [0, 0], sizes = [2, 64], strides = [1, 1]} : vector<2x256xf32> to vector<2x64xf32>
    %150 = vector.extract_strided_slice %148 {offsets = [0, 64], sizes = [2, 64], strides = [1, 1]} : vector<2x256xf32> to vector<2x64xf32>
    %151 = vector.extract_strided_slice %148 {offsets = [0, 128], sizes = [2, 64], strides = [1, 1]} : vector<2x256xf32> to vector<2x64xf32>
    %cst_45 = arith.constant 2.000000e+00 : f32
    %152 = vector.broadcast %cst_45 : f32 to vector<2x64xf32>
    %153 = arith.mulf %152, %151 : vector<2x64xf32>
    %cst_46 = arith.constant 1.000000e+00 : f32
    %154 = vector.broadcast %cst_46 : f32 to vector<2x64xf32>
    %155 = arith.subf %153, %154 : vector<2x64xf32>
    %156 = vector.extract_strided_slice %148 {offsets = [0, 192], sizes = [2, 64], strides = [1, 1]} : vector<2x256xf32> to vector<2x64xf32>
    %157 = arith.mulf %150, %107 : vector<2x64xf32>
    %158 = arith.mulf %149, %155 : vector<2x64xf32>
    %159 = arith.addf %157, %158 : vector<2x64xf32>
    %160 = math.tanh %159 : vector<2x64xf32>
    %161 = arith.mulf %156, %160 : vector<2x64xf32>
    %162 = vector.extract_strided_slice %9 {offsets = [2, 0], sizes = [1, 64], strides = [1, 1]} : vector<8x64xf32> to vector<1x64xf32>
    %163 = vector.broadcast %162 : vector<1x64xf32> to vector<2x64xf32>
    %164 = arith.mulf %161, %163 : vector<2x64xf32>
    %165 = arith.addf %113, %164 : vector<2x64xf32>
    %166 = vector.extract_strided_slice %7 {offsets = [0, 3, 0], sizes = [2, 1, 256], strides = [1, 1, 1]} : vector<2x8x256xf32> to vector<2x1x256xf32>
    %167 = vector.shape_cast %166 : vector<2x1x256xf32> to vector<2x256xf32>
    %168 = arith.truncf %137 : vector<2x64xf32> to vector<2x64xbf16>
    %c0_47 = arith.constant 0 : index
    %c0_48 = arith.constant 0 : index
    %169 = vector.load %arg3[%c0_47, %c0_48] : memref<64x256xbf16, #tpu.memory_space<vmem>>, vector<64x256xbf16>
    %cst_49 = arith.constant dense<0.000000e+00> : vector<2x256xf32>
    %170 = tpu.matmul %168, %169, %cst_49 {dimension_numbers = #tpu.dot_dimension_numbers<[1], [0], [0], [1], [0, 0, 1, 1], [], []>} : vector<2x64xbf16>, vector<64x256xbf16>, vector<2x256xf32> -> vector<2x256xf32>
    %171 = arith.addf %167, %170 : vector<2x256xf32>
    %172 = arith.negf %171 : vector<2x256xf32>
    %173 = math.exp %172 : vector<2x256xf32>
    %cst_50 = arith.constant 1.000000e+00 : f32
    %174 = vector.broadcast %cst_50 : f32 to vector<2x256xf32>
    %175 = arith.addf %174, %173 : vector<2x256xf32>
    %176 = arith.divf %174, %175 : vector<2x256xf32>
    %177 = vector.extract_strided_slice %176 {offsets = [0, 0], sizes = [2, 64], strides = [1, 1]} : vector<2x256xf32> to vector<2x64xf32>
    %178 = vector.extract_strided_slice %176 {offsets = [0, 64], sizes = [2, 64], strides = [1, 1]} : vector<2x256xf32> to vector<2x64xf32>
    %179 = vector.extract_strided_slice %176 {offsets = [0, 128], sizes = [2, 64], strides = [1, 1]} : vector<2x256xf32> to vector<2x64xf32>
    %cst_51 = arith.constant 2.000000e+00 : f32
    %180 = vector.broadcast %cst_51 : f32 to vector<2x64xf32>
    %181 = arith.mulf %180, %179 : vector<2x64xf32>
    %cst_52 = arith.constant 1.000000e+00 : f32
    %182 = vector.broadcast %cst_52 : f32 to vector<2x64xf32>
    %183 = arith.subf %181, %182 : vector<2x64xf32>
    %184 = vector.extract_strided_slice %176 {offsets = [0, 192], sizes = [2, 64], strides = [1, 1]} : vector<2x256xf32> to vector<2x64xf32>
    %185 = arith.mulf %178, %135 : vector<2x64xf32>
    %186 = arith.mulf %177, %183 : vector<2x64xf32>
    %187 = arith.addf %185, %186 : vector<2x64xf32>
    %188 = math.tanh %187 : vector<2x64xf32>
    %189 = arith.mulf %184, %188 : vector<2x64xf32>
    %190 = tpu.concatenate %189, %161 in 1 : vector<2x64xf32>, vector<2x64xf32> -> vector<2x128xf32>
    %191 = arith.truncf %190 : vector<2x128xf32> to vector<2x128xbf16>
    %c0_53 = arith.constant 0 : index
    %c0_54 = arith.constant 0 : index
    %192 = vector.load %arg5[%c0_53, %c0_54] : memref<128x256xbf16, #tpu.memory_space<vmem>>, vector<128x256xbf16>
    %cst_55 = arith.constant dense<0.000000e+00> : vector<2x256xf32>
    %193 = tpu.matmul %191, %192, %cst_55 {dimension_numbers = #tpu.dot_dimension_numbers<[1], [0], [0], [1], [0, 0, 1, 1], [], []>} : vector<2x128xbf16>, vector<128x256xbf16>, vector<2x256xf32> -> vector<2x256xf32>
    %194 = vector.broadcast %8 : vector<1x256xf32> to vector<2x256xf32>
    %195 = arith.addf %193, %194 : vector<2x256xf32>
    %196 = arith.negf %195 : vector<2x256xf32>
    %197 = math.exp %196 : vector<2x256xf32>
    %cst_56 = arith.constant 1.000000e+00 : f32
    %198 = vector.broadcast %cst_56 : f32 to vector<2x256xf32>
    %199 = arith.addf %198, %197 : vector<2x256xf32>
    %200 = arith.divf %198, %199 : vector<2x256xf32>
    %201 = vector.extract_strided_slice %200 {offsets = [0, 0], sizes = [2, 64], strides = [1, 1]} : vector<2x256xf32> to vector<2x64xf32>
    %202 = vector.extract_strided_slice %200 {offsets = [0, 64], sizes = [2, 64], strides = [1, 1]} : vector<2x256xf32> to vector<2x64xf32>
    %203 = vector.extract_strided_slice %200 {offsets = [0, 128], sizes = [2, 64], strides = [1, 1]} : vector<2x256xf32> to vector<2x64xf32>
    %cst_57 = arith.constant 2.000000e+00 : f32
    %204 = vector.broadcast %cst_57 : f32 to vector<2x64xf32>
    %205 = arith.mulf %204, %203 : vector<2x64xf32>
    %cst_58 = arith.constant 1.000000e+00 : f32
    %206 = vector.broadcast %cst_58 : f32 to vector<2x64xf32>
    %207 = arith.subf %205, %206 : vector<2x64xf32>
    %208 = vector.extract_strided_slice %200 {offsets = [0, 192], sizes = [2, 64], strides = [1, 1]} : vector<2x256xf32> to vector<2x64xf32>
    %209 = arith.mulf %202, %159 : vector<2x64xf32>
    %210 = arith.mulf %201, %207 : vector<2x64xf32>
    %211 = arith.addf %209, %210 : vector<2x64xf32>
    %212 = math.tanh %211 : vector<2x64xf32>
    %213 = arith.mulf %208, %212 : vector<2x64xf32>
    %214 = vector.extract_strided_slice %9 {offsets = [3, 0], sizes = [1, 64], strides = [1, 1]} : vector<8x64xf32> to vector<1x64xf32>
    %215 = vector.broadcast %214 : vector<1x64xf32> to vector<2x64xf32>
    %216 = arith.mulf %213, %215 : vector<2x64xf32>
    %217 = arith.addf %165, %216 : vector<2x64xf32>
    %218 = vector.extract_strided_slice %7 {offsets = [0, 4, 0], sizes = [2, 1, 256], strides = [1, 1, 1]} : vector<2x8x256xf32> to vector<2x1x256xf32>
    %219 = vector.shape_cast %218 : vector<2x1x256xf32> to vector<2x256xf32>
    %220 = arith.truncf %189 : vector<2x64xf32> to vector<2x64xbf16>
    %c0_59 = arith.constant 0 : index
    %c0_60 = arith.constant 0 : index
    %221 = vector.load %arg3[%c0_59, %c0_60] : memref<64x256xbf16, #tpu.memory_space<vmem>>, vector<64x256xbf16>
    %cst_61 = arith.constant dense<0.000000e+00> : vector<2x256xf32>
    %222 = tpu.matmul %220, %221, %cst_61 {dimension_numbers = #tpu.dot_dimension_numbers<[1], [0], [0], [1], [0, 0, 1, 1], [], []>} : vector<2x64xbf16>, vector<64x256xbf16>, vector<2x256xf32> -> vector<2x256xf32>
    %223 = arith.addf %219, %222 : vector<2x256xf32>
    %224 = arith.negf %223 : vector<2x256xf32>
    %225 = math.exp %224 : vector<2x256xf32>
    %cst_62 = arith.constant 1.000000e+00 : f32
    %226 = vector.broadcast %cst_62 : f32 to vector<2x256xf32>
    %227 = arith.addf %226, %225 : vector<2x256xf32>
    %228 = arith.divf %226, %227 : vector<2x256xf32>
    %229 = vector.extract_strided_slice %228 {offsets = [0, 0], sizes = [2, 64], strides = [1, 1]} : vector<2x256xf32> to vector<2x64xf32>
    %230 = vector.extract_strided_slice %228 {offsets = [0, 64], sizes = [2, 64], strides = [1, 1]} : vector<2x256xf32> to vector<2x64xf32>
    %231 = vector.extract_strided_slice %228 {offsets = [0, 128], sizes = [2, 64], strides = [1, 1]} : vector<2x256xf32> to vector<2x64xf32>
    %cst_63 = arith.constant 2.000000e+00 : f32
    %232 = vector.broadcast %cst_63 : f32 to vector<2x64xf32>
    %233 = arith.mulf %232, %231 : vector<2x64xf32>
    %cst_64 = arith.constant 1.000000e+00 : f32
    %234 = vector.broadcast %cst_64 : f32 to vector<2x64xf32>
    %235 = arith.subf %233, %234 : vector<2x64xf32>
    %236 = vector.extract_strided_slice %228 {offsets = [0, 192], sizes = [2, 64], strides = [1, 1]} : vector<2x256xf32> to vector<2x64xf32>
    %237 = arith.mulf %230, %187 : vector<2x64xf32>
    %238 = arith.mulf %229, %235 : vector<2x64xf32>
    %239 = arith.addf %237, %238 : vector<2x64xf32>
    %240 = math.tanh %239 : vector<2x64xf32>
    %241 = arith.mulf %236, %240 : vector<2x64xf32>
    %242 = tpu.concatenate %241, %213 in 1 : vector<2x64xf32>, vector<2x64xf32> -> vector<2x128xf32>
    %243 = arith.truncf %242 : vector<2x128xf32> to vector<2x128xbf16>
    %c0_65 = arith.constant 0 : index
    %c0_66 = arith.constant 0 : index
    %244 = vector.load %arg5[%c0_65, %c0_66] : memref<128x256xbf16, #tpu.memory_space<vmem>>, vector<128x256xbf16>
    %cst_67 = arith.constant dense<0.000000e+00> : vector<2x256xf32>
    %245 = tpu.matmul %243, %244, %cst_67 {dimension_numbers = #tpu.dot_dimension_numbers<[1], [0], [0], [1], [0, 0, 1, 1], [], []>} : vector<2x128xbf16>, vector<128x256xbf16>, vector<2x256xf32> -> vector<2x256xf32>
    %246 = vector.broadcast %8 : vector<1x256xf32> to vector<2x256xf32>
    %247 = arith.addf %245, %246 : vector<2x256xf32>
    %248 = arith.negf %247 : vector<2x256xf32>
    %249 = math.exp %248 : vector<2x256xf32>
    %cst_68 = arith.constant 1.000000e+00 : f32
    %250 = vector.broadcast %cst_68 : f32 to vector<2x256xf32>
    %251 = arith.addf %250, %249 : vector<2x256xf32>
    %252 = arith.divf %250, %251 : vector<2x256xf32>
    %253 = vector.extract_strided_slice %252 {offsets = [0, 0], sizes = [2, 64], strides = [1, 1]} : vector<2x256xf32> to vector<2x64xf32>
    %254 = vector.extract_strided_slice %252 {offsets = [0, 64], sizes = [2, 64], strides = [1, 1]} : vector<2x256xf32> to vector<2x64xf32>
    %255 = vector.extract_strided_slice %252 {offsets = [0, 128], sizes = [2, 64], strides = [1, 1]} : vector<2x256xf32> to vector<2x64xf32>
    %cst_69 = arith.constant 2.000000e+00 : f32
    %256 = vector.broadcast %cst_69 : f32 to vector<2x64xf32>
    %257 = arith.mulf %256, %255 : vector<2x64xf32>
    %cst_70 = arith.constant 1.000000e+00 : f32
    %258 = vector.broadcast %cst_70 : f32 to vector<2x64xf32>
    %259 = arith.subf %257, %258 : vector<2x64xf32>
    %260 = vector.extract_strided_slice %252 {offsets = [0, 192], sizes = [2, 64], strides = [1, 1]} : vector<2x256xf32> to vector<2x64xf32>
    %261 = arith.mulf %254, %211 : vector<2x64xf32>
    %262 = arith.mulf %253, %259 : vector<2x64xf32>
    %263 = arith.addf %261, %262 : vector<2x64xf32>
    %264 = math.tanh %263 : vector<2x64xf32>
    %265 = arith.mulf %260, %264 : vector<2x64xf32>
    %266 = vector.extract_strided_slice %9 {offsets = [4, 0], sizes = [1, 64], strides = [1, 1]} : vector<8x64xf32> to vector<1x64xf32>
    %267 = vector.broadcast %266 : vector<1x64xf32> to vector<2x64xf32>
    %268 = arith.mulf %265, %267 : vector<2x64xf32>
    %269 = arith.addf %217, %268 : vector<2x64xf32>
    %270 = vector.extract_strided_slice %7 {offsets = [0, 5, 0], sizes = [2, 1, 256], strides = [1, 1, 1]} : vector<2x8x256xf32> to vector<2x1x256xf32>
    %271 = vector.shape_cast %270 : vector<2x1x256xf32> to vector<2x256xf32>
    %272 = arith.truncf %241 : vector<2x64xf32> to vector<2x64xbf16>
    %c0_71 = arith.constant 0 : index
    %c0_72 = arith.constant 0 : index
    %273 = vector.load %arg3[%c0_71, %c0_72] : memref<64x256xbf16, #tpu.memory_space<vmem>>, vector<64x256xbf16>
    %cst_73 = arith.constant dense<0.000000e+00> : vector<2x256xf32>
    %274 = tpu.matmul %272, %273, %cst_73 {dimension_numbers = #tpu.dot_dimension_numbers<[1], [0], [0], [1], [0, 0, 1, 1], [], []>} : vector<2x64xbf16>, vector<64x256xbf16>, vector<2x256xf32> -> vector<2x256xf32>
    %275 = arith.addf %271, %274 : vector<2x256xf32>
    %276 = arith.negf %275 : vector<2x256xf32>
    %277 = math.exp %276 : vector<2x256xf32>
    %cst_74 = arith.constant 1.000000e+00 : f32
    %278 = vector.broadcast %cst_74 : f32 to vector<2x256xf32>
    %279 = arith.addf %278, %277 : vector<2x256xf32>
    %280 = arith.divf %278, %279 : vector<2x256xf32>
    %281 = vector.extract_strided_slice %280 {offsets = [0, 0], sizes = [2, 64], strides = [1, 1]} : vector<2x256xf32> to vector<2x64xf32>
    %282 = vector.extract_strided_slice %280 {offsets = [0, 64], sizes = [2, 64], strides = [1, 1]} : vector<2x256xf32> to vector<2x64xf32>
    %283 = vector.extract_strided_slice %280 {offsets = [0, 128], sizes = [2, 64], strides = [1, 1]} : vector<2x256xf32> to vector<2x64xf32>
    %cst_75 = arith.constant 2.000000e+00 : f32
    %284 = vector.broadcast %cst_75 : f32 to vector<2x64xf32>
    %285 = arith.mulf %284, %283 : vector<2x64xf32>
    %cst_76 = arith.constant 1.000000e+00 : f32
    %286 = vector.broadcast %cst_76 : f32 to vector<2x64xf32>
    %287 = arith.subf %285, %286 : vector<2x64xf32>
    %288 = vector.extract_strided_slice %280 {offsets = [0, 192], sizes = [2, 64], strides = [1, 1]} : vector<2x256xf32> to vector<2x64xf32>
    %289 = arith.mulf %282, %239 : vector<2x64xf32>
    %290 = arith.mulf %281, %287 : vector<2x64xf32>
    %291 = arith.addf %289, %290 : vector<2x64xf32>
    %292 = math.tanh %291 : vector<2x64xf32>
    %293 = arith.mulf %288, %292 : vector<2x64xf32>
    %294 = tpu.concatenate %293, %265 in 1 : vector<2x64xf32>, vector<2x64xf32> -> vector<2x128xf32>
    %295 = arith.truncf %294 : vector<2x128xf32> to vector<2x128xbf16>
    %c0_77 = arith.constant 0 : index
    %c0_78 = arith.constant 0 : index
    %296 = vector.load %arg5[%c0_77, %c0_78] : memref<128x256xbf16, #tpu.memory_space<vmem>>, vector<128x256xbf16>
    %cst_79 = arith.constant dense<0.000000e+00> : vector<2x256xf32>
    %297 = tpu.matmul %295, %296, %cst_79 {dimension_numbers = #tpu.dot_dimension_numbers<[1], [0], [0], [1], [0, 0, 1, 1], [], []>} : vector<2x128xbf16>, vector<128x256xbf16>, vector<2x256xf32> -> vector<2x256xf32>
    %298 = vector.broadcast %8 : vector<1x256xf32> to vector<2x256xf32>
    %299 = arith.addf %297, %298 : vector<2x256xf32>
    %300 = arith.negf %299 : vector<2x256xf32>
    %301 = math.exp %300 : vector<2x256xf32>
    %cst_80 = arith.constant 1.000000e+00 : f32
    %302 = vector.broadcast %cst_80 : f32 to vector<2x256xf32>
    %303 = arith.addf %302, %301 : vector<2x256xf32>
    %304 = arith.divf %302, %303 : vector<2x256xf32>
    %305 = vector.extract_strided_slice %304 {offsets = [0, 0], sizes = [2, 64], strides = [1, 1]} : vector<2x256xf32> to vector<2x64xf32>
    %306 = vector.extract_strided_slice %304 {offsets = [0, 64], sizes = [2, 64], strides = [1, 1]} : vector<2x256xf32> to vector<2x64xf32>
    %307 = vector.extract_strided_slice %304 {offsets = [0, 128], sizes = [2, 64], strides = [1, 1]} : vector<2x256xf32> to vector<2x64xf32>
    %cst_81 = arith.constant 2.000000e+00 : f32
    %308 = vector.broadcast %cst_81 : f32 to vector<2x64xf32>
    %309 = arith.mulf %308, %307 : vector<2x64xf32>
    %cst_82 = arith.constant 1.000000e+00 : f32
    %310 = vector.broadcast %cst_82 : f32 to vector<2x64xf32>
    %311 = arith.subf %309, %310 : vector<2x64xf32>
    %312 = vector.extract_strided_slice %304 {offsets = [0, 192], sizes = [2, 64], strides = [1, 1]} : vector<2x256xf32> to vector<2x64xf32>
    %313 = arith.mulf %306, %263 : vector<2x64xf32>
    %314 = arith.mulf %305, %311 : vector<2x64xf32>
    %315 = arith.addf %313, %314 : vector<2x64xf32>
    %316 = math.tanh %315 : vector<2x64xf32>
    %317 = arith.mulf %312, %316 : vector<2x64xf32>
    %318 = vector.extract_strided_slice %9 {offsets = [5, 0], sizes = [1, 64], strides = [1, 1]} : vector<8x64xf32> to vector<1x64xf32>
    %319 = vector.broadcast %318 : vector<1x64xf32> to vector<2x64xf32>
    %320 = arith.mulf %317, %319 : vector<2x64xf32>
    %321 = arith.addf %269, %320 : vector<2x64xf32>
    %322 = vector.extract_strided_slice %7 {offsets = [0, 6, 0], sizes = [2, 1, 256], strides = [1, 1, 1]} : vector<2x8x256xf32> to vector<2x1x256xf32>
    %323 = vector.shape_cast %322 : vector<2x1x256xf32> to vector<2x256xf32>
    %324 = arith.truncf %293 : vector<2x64xf32> to vector<2x64xbf16>
    %c0_83 = arith.constant 0 : index
    %c0_84 = arith.constant 0 : index
    %325 = vector.load %arg3[%c0_83, %c0_84] : memref<64x256xbf16, #tpu.memory_space<vmem>>, vector<64x256xbf16>
    %cst_85 = arith.constant dense<0.000000e+00> : vector<2x256xf32>
    %326 = tpu.matmul %324, %325, %cst_85 {dimension_numbers = #tpu.dot_dimension_numbers<[1], [0], [0], [1], [0, 0, 1, 1], [], []>} : vector<2x64xbf16>, vector<64x256xbf16>, vector<2x256xf32> -> vector<2x256xf32>
    %327 = arith.addf %323, %326 : vector<2x256xf32>
    %328 = arith.negf %327 : vector<2x256xf32>
    %329 = math.exp %328 : vector<2x256xf32>
    %cst_86 = arith.constant 1.000000e+00 : f32
    %330 = vector.broadcast %cst_86 : f32 to vector<2x256xf32>
    %331 = arith.addf %330, %329 : vector<2x256xf32>
    %332 = arith.divf %330, %331 : vector<2x256xf32>
    %333 = vector.extract_strided_slice %332 {offsets = [0, 0], sizes = [2, 64], strides = [1, 1]} : vector<2x256xf32> to vector<2x64xf32>
    %334 = vector.extract_strided_slice %332 {offsets = [0, 64], sizes = [2, 64], strides = [1, 1]} : vector<2x256xf32> to vector<2x64xf32>
    %335 = vector.extract_strided_slice %332 {offsets = [0, 128], sizes = [2, 64], strides = [1, 1]} : vector<2x256xf32> to vector<2x64xf32>
    %cst_87 = arith.constant 2.000000e+00 : f32
    %336 = vector.broadcast %cst_87 : f32 to vector<2x64xf32>
    %337 = arith.mulf %336, %335 : vector<2x64xf32>
    %cst_88 = arith.constant 1.000000e+00 : f32
    %338 = vector.broadcast %cst_88 : f32 to vector<2x64xf32>
    %339 = arith.subf %337, %338 : vector<2x64xf32>
    %340 = vector.extract_strided_slice %332 {offsets = [0, 192], sizes = [2, 64], strides = [1, 1]} : vector<2x256xf32> to vector<2x64xf32>
    %341 = arith.mulf %334, %291 : vector<2x64xf32>
    %342 = arith.mulf %333, %339 : vector<2x64xf32>
    %343 = arith.addf %341, %342 : vector<2x64xf32>
    %344 = math.tanh %343 : vector<2x64xf32>
    %345 = arith.mulf %340, %344 : vector<2x64xf32>
    %346 = tpu.concatenate %345, %317 in 1 : vector<2x64xf32>, vector<2x64xf32> -> vector<2x128xf32>
    %347 = arith.truncf %346 : vector<2x128xf32> to vector<2x128xbf16>
    %c0_89 = arith.constant 0 : index
    %c0_90 = arith.constant 0 : index
    %348 = vector.load %arg5[%c0_89, %c0_90] : memref<128x256xbf16, #tpu.memory_space<vmem>>, vector<128x256xbf16>
    %cst_91 = arith.constant dense<0.000000e+00> : vector<2x256xf32>
    %349 = tpu.matmul %347, %348, %cst_91 {dimension_numbers = #tpu.dot_dimension_numbers<[1], [0], [0], [1], [0, 0, 1, 1], [], []>} : vector<2x128xbf16>, vector<128x256xbf16>, vector<2x256xf32> -> vector<2x256xf32>
    %350 = vector.broadcast %8 : vector<1x256xf32> to vector<2x256xf32>
    %351 = arith.addf %349, %350 : vector<2x256xf32>
    %352 = arith.negf %351 : vector<2x256xf32>
    %353 = math.exp %352 : vector<2x256xf32>
    %cst_92 = arith.constant 1.000000e+00 : f32
    %354 = vector.broadcast %cst_92 : f32 to vector<2x256xf32>
    %355 = arith.addf %354, %353 : vector<2x256xf32>
    %356 = arith.divf %354, %355 : vector<2x256xf32>
    %357 = vector.extract_strided_slice %356 {offsets = [0, 0], sizes = [2, 64], strides = [1, 1]} : vector<2x256xf32> to vector<2x64xf32>
    %358 = vector.extract_strided_slice %356 {offsets = [0, 64], sizes = [2, 64], strides = [1, 1]} : vector<2x256xf32> to vector<2x64xf32>
    %359 = vector.extract_strided_slice %356 {offsets = [0, 128], sizes = [2, 64], strides = [1, 1]} : vector<2x256xf32> to vector<2x64xf32>
    %cst_93 = arith.constant 2.000000e+00 : f32
    %360 = vector.broadcast %cst_93 : f32 to vector<2x64xf32>
    %361 = arith.mulf %360, %359 : vector<2x64xf32>
    %cst_94 = arith.constant 1.000000e+00 : f32
    %362 = vector.broadcast %cst_94 : f32 to vector<2x64xf32>
    %363 = arith.subf %361, %362 : vector<2x64xf32>
    %364 = vector.extract_strided_slice %356 {offsets = [0, 192], sizes = [2, 64], strides = [1, 1]} : vector<2x256xf32> to vector<2x64xf32>
    %365 = arith.mulf %358, %315 : vector<2x64xf32>
    %366 = arith.mulf %357, %363 : vector<2x64xf32>
    %367 = arith.addf %365, %366 : vector<2x64xf32>
    %368 = math.tanh %367 : vector<2x64xf32>
    %369 = arith.mulf %364, %368 : vector<2x64xf32>
    %370 = vector.extract_strided_slice %9 {offsets = [6, 0], sizes = [1, 64], strides = [1, 1]} : vector<8x64xf32> to vector<1x64xf32>
    %371 = vector.broadcast %370 : vector<1x64xf32> to vector<2x64xf32>
    %372 = arith.mulf %369, %371 : vector<2x64xf32>
    %373 = arith.addf %321, %372 : vector<2x64xf32>
    %374 = vector.extract_strided_slice %7 {offsets = [0, 7, 0], sizes = [2, 1, 256], strides = [1, 1, 1]} : vector<2x8x256xf32> to vector<2x1x256xf32>
    %375 = vector.shape_cast %374 : vector<2x1x256xf32> to vector<2x256xf32>
    %376 = arith.truncf %345 : vector<2x64xf32> to vector<2x64xbf16>
    %c0_95 = arith.constant 0 : index
    %c0_96 = arith.constant 0 : index
    %377 = vector.load %arg3[%c0_95, %c0_96] : memref<64x256xbf16, #tpu.memory_space<vmem>>, vector<64x256xbf16>
    %cst_97 = arith.constant dense<0.000000e+00> : vector<2x256xf32>
    %378 = tpu.matmul %376, %377, %cst_97 {dimension_numbers = #tpu.dot_dimension_numbers<[1], [0], [0], [1], [0, 0, 1, 1], [], []>} : vector<2x64xbf16>, vector<64x256xbf16>, vector<2x256xf32> -> vector<2x256xf32>
    %379 = arith.addf %375, %378 : vector<2x256xf32>
    %380 = arith.negf %379 : vector<2x256xf32>
    %381 = math.exp %380 : vector<2x256xf32>
    %cst_98 = arith.constant 1.000000e+00 : f32
    %382 = vector.broadcast %cst_98 : f32 to vector<2x256xf32>
    %383 = arith.addf %382, %381 : vector<2x256xf32>
    %384 = arith.divf %382, %383 : vector<2x256xf32>
    %385 = vector.extract_strided_slice %384 {offsets = [0, 0], sizes = [2, 64], strides = [1, 1]} : vector<2x256xf32> to vector<2x64xf32>
    %386 = vector.extract_strided_slice %384 {offsets = [0, 64], sizes = [2, 64], strides = [1, 1]} : vector<2x256xf32> to vector<2x64xf32>
    %387 = vector.extract_strided_slice %384 {offsets = [0, 128], sizes = [2, 64], strides = [1, 1]} : vector<2x256xf32> to vector<2x64xf32>
    %cst_99 = arith.constant 2.000000e+00 : f32
    %388 = vector.broadcast %cst_99 : f32 to vector<2x64xf32>
    %389 = arith.mulf %388, %387 : vector<2x64xf32>
    %cst_100 = arith.constant 1.000000e+00 : f32
    %390 = vector.broadcast %cst_100 : f32 to vector<2x64xf32>
    %391 = arith.subf %389, %390 : vector<2x64xf32>
    %392 = vector.extract_strided_slice %384 {offsets = [0, 192], sizes = [2, 64], strides = [1, 1]} : vector<2x256xf32> to vector<2x64xf32>
    %393 = arith.mulf %386, %343 : vector<2x64xf32>
    %394 = arith.mulf %385, %391 : vector<2x64xf32>
    %395 = arith.addf %393, %394 : vector<2x64xf32>
    %396 = math.tanh %395 : vector<2x64xf32>
    %397 = arith.mulf %392, %396 : vector<2x64xf32>
    %398 = tpu.concatenate %397, %369 in 1 : vector<2x64xf32>, vector<2x64xf32> -> vector<2x128xf32>
    %399 = arith.truncf %398 : vector<2x128xf32> to vector<2x128xbf16>
    %c0_101 = arith.constant 0 : index
    %c0_102 = arith.constant 0 : index
    %400 = vector.load %arg5[%c0_101, %c0_102] : memref<128x256xbf16, #tpu.memory_space<vmem>>, vector<128x256xbf16>
    %cst_103 = arith.constant dense<0.000000e+00> : vector<2x256xf32>
    %401 = tpu.matmul %399, %400, %cst_103 {dimension_numbers = #tpu.dot_dimension_numbers<[1], [0], [0], [1], [0, 0, 1, 1], [], []>} : vector<2x128xbf16>, vector<128x256xbf16>, vector<2x256xf32> -> vector<2x256xf32>
    %402 = vector.broadcast %8 : vector<1x256xf32> to vector<2x256xf32>
    %403 = arith.addf %401, %402 : vector<2x256xf32>
    %404 = arith.negf %403 : vector<2x256xf32>
    %405 = math.exp %404 : vector<2x256xf32>
    %cst_104 = arith.constant 1.000000e+00 : f32
    %406 = vector.broadcast %cst_104 : f32 to vector<2x256xf32>
    %407 = arith.addf %406, %405 : vector<2x256xf32>
    %408 = arith.divf %406, %407 : vector<2x256xf32>
    %409 = vector.extract_strided_slice %408 {offsets = [0, 0], sizes = [2, 64], strides = [1, 1]} : vector<2x256xf32> to vector<2x64xf32>
    %410 = vector.extract_strided_slice %408 {offsets = [0, 64], sizes = [2, 64], strides = [1, 1]} : vector<2x256xf32> to vector<2x64xf32>
    %411 = vector.extract_strided_slice %408 {offsets = [0, 128], sizes = [2, 64], strides = [1, 1]} : vector<2x256xf32> to vector<2x64xf32>
    %cst_105 = arith.constant 2.000000e+00 : f32
    %412 = vector.broadcast %cst_105 : f32 to vector<2x64xf32>
    %413 = arith.mulf %412, %411 : vector<2x64xf32>
    %cst_106 = arith.constant 1.000000e+00 : f32
    %414 = vector.broadcast %cst_106 : f32 to vector<2x64xf32>
    %415 = arith.subf %413, %414 : vector<2x64xf32>
    %416 = vector.extract_strided_slice %408 {offsets = [0, 192], sizes = [2, 64], strides = [1, 1]} : vector<2x256xf32> to vector<2x64xf32>
    %417 = arith.mulf %410, %367 : vector<2x64xf32>
    %418 = arith.mulf %409, %415 : vector<2x64xf32>
    %419 = arith.addf %417, %418 : vector<2x64xf32>
    %420 = math.tanh %419 : vector<2x64xf32>
    %421 = arith.mulf %416, %420 : vector<2x64xf32>
    %422 = vector.extract_strided_slice %9 {offsets = [7, 0], sizes = [1, 64], strides = [1, 1]} : vector<8x64xf32> to vector<1x64xf32>
    %423 = vector.broadcast %422 : vector<1x64xf32> to vector<2x64xf32>
    %424 = arith.mulf %421, %423 : vector<2x64xf32>
    %425 = arith.addf %373, %424 : vector<2x64xf32>
    %cst_107 = arith.constant dense<0.000000e+00> : vector<2xf32>
    %426 = vector.multi_reduction <add>, %425, %cst_107 [1] : vector<2x64xf32> to vector<2xf32>
    %427 = vector.shape_cast %426 : vector<2xf32> to vector<2x1xf32>
    %c0_108 = arith.constant 0 : index
    %c0_109 = arith.constant 0 : index
    %428 = vector.load %arg8[%c0_108, %c0_109] : memref<1x1xf32, #tpu.memory_space<vmem>>, vector<1x1xf32>
    %429 = vector.broadcast %428 : vector<1x1xf32> to vector<2x1xf32>
    %430 = arith.addf %427, %429 : vector<2x1xf32>
    %c0_110 = arith.constant 0 : index
    %c0_111 = arith.constant 0 : index
    %431 = vector.load %arg9[%c0_110, %c0_111] : memref<2x1xf32, #tpu.memory_space<vmem>>, vector<2x1xf32>
    tpu.vector_store %arg9[%c0_110, %c0_111], %430 {strides = array<i32>} : memref<2x1xf32, #tpu.memory_space<vmem>>, vector<2x1xf32>,
    return
  }
  func.func @transform_0(%arg0: i32) -> (i32, i32, i32) {
    %c0_i32 = arith.constant 0 : i32
    %c0_i32_0 = arith.constant 0 : i32
    %c0_i32_1 = arith.constant 0 : i32
    return %arg0, %c0_i32, %c0_i32_0 : i32, i32, i32
  }
  func.func @transform_1(%arg0: i32) -> (i32, i32) {
    %c0_i32 = arith.constant 0 : i32
    %c0_i32_0 = arith.constant 0 : i32
    %c0_i32_1 = arith.constant 0 : i32
    return %c0_i32, %c0_i32_0 : i32, i32
  }
  func.func @transform_2(%arg0: i32) -> (i32, i32) {
    %c0_i32 = arith.constant 0 : i32
    %c0_i32_0 = arith.constant 0 : i32
    %c0_i32_1 = arith.constant 0 : i32
    return %c0_i32, %c0_i32_0 : i32, i32
  }
  func.func @transform_3(%arg0: i32) -> (i32, i32) {
    %c0_i32 = arith.constant 0 : i32
    %c0_i32_0 = arith.constant 0 : i32
    %c0_i32_1 = arith.constant 0 : i32
    return %c0_i32, %c0_i32_0 : i32, i32
  }
  func.func @transform_4(%arg0: i32) -> (i32, i32) {
    %c0_i32 = arith.constant 0 : i32
    %c0_i32_0 = arith.constant 0 : i32
    %c0_i32_1 = arith.constant 0 : i32
    return %c0_i32, %c0_i32_0 : i32, i32
  }
  func.func @transform_5(%arg0: i32) -> (i32, i32) {
    %c0_i32 = arith.constant 0 : i32
    %c0_i32_0 = arith.constant 0 : i32
    %c0_i32_1 = arith.constant 0 : i32
    return %c0_i32, %c0_i32_0 : i32, i32
  }
  func.func @transform_6(%arg0: i32) -> (i32, i32) {
    %c0_i32 = arith.constant 0 : i32
    %c0_i32_0 = arith.constant 0 : i32
    %c0_i32_1 = arith.constant 0 : i32
    return %c0_i32, %c0_i32_0 : i32, i32
  }
  func.func @transform_7(%arg0: i32) -> (i32, i32) {
    %c0_i32 = arith.constant 0 : i32
    %c0_i32_0 = arith.constant 0 : i32
    %c0_i32_1 = arith.constant 0 : i32
    return %c0_i32, %c0_i32_0 : i32, i32
  }
  func.func @transform_8(%arg0: i32) -> (i32, i32) {
    %c0_i32 = arith.constant 0 : i32
    %c0_i32_0 = arith.constant 0 : i32
    return %arg0, %c0_i32 : i32, i32
  }
}

</mosaic_0001>

<llo_original>
// kernel: lstm_cnn_forward.1
$region0: #{lstm_cnn_forward.1}
  #allocation0 [shape = 'u32[]', space=smem, size = 0x4, offset = 0x4, fixed_abs, tag = 'smem constant byte address 0x4 - core index']
  #allocation1 [shape = 'u32[144,128]{1,0:T(1,128)}', space=vmem, size = 0x12000, scoped, tag = 'internal scratch']
  #allocation2 [shape = 'f32[1,1]{1,0:T(1,128)S(1)}', space=vmem, size = 0x200, scoped, tag = 'scoped memory for lstm_cnn_forward.1']
  %s0 = inlined_call_operand.vmem [shape: bf16[2,8,16], index: 0, kind: input, shape index: {}]
  %s1 = inlined_call_operand.vmem [shape: bf16[16,256], index: 1, kind: input, shape index: {}]
  %s2 = inlined_call_operand.hbm [shape: bf16[64,256], index: 2, kind: input, shape index: {}]
  %s3 = inlined_call_operand.vmem [shape: f32[1,256], index: 3, kind: input, shape index: {}]
  %s4 = inlined_call_operand.hbm [shape: bf16[128,256], index: 4, kind: input, shape index: {}]
  %s5 = inlined_call_operand.vmem [shape: f32[1,256], index: 5, kind: input, shape index: {}]
  %s6 = inlined_call_operand.vmem [shape: f32[8,64], index: 6, kind: input, shape index: {}]
  %s7 = inlined_call_operand.<no memory space> [shape: f32[1,1], index: 7, kind: input, shape index: {}]
  %s8 = inlined_call_operand.vmem [shape: f32[2,1], index: 8, kind: output, shape index: {}]
  %s9 = sld [smem:[#allocation0]]
  $region50: #{lstm_cnn_forward.1} parent=0
    _
  %s11 = ssub.s32 1, %s9
  %s12 = scalar_select 0, %s11, %s9
  %v13 = vstv %s7
  %14 = vst [vmem:[#allocation2] sm:$0x1] %v13
  $region1: #{lstm_cnn_forward.1} parent=0
    #allocation3 [shape = 'u8[32768]{0}', space=vmem, size = 0x8000, scoped, tag = 'input window, operand 2, single buffered']
    #allocation4 [shape = 's32[1]{0}', space=sflag, size = 0x4, scoped, tag = 'scoped memory for lstm_cnn_forward.1']
    #allocation5 [shape = 'u8[65536]{0}', space=vmem, size = 0x10000, scoped, tag = 'input window, operand 4, single buffered']
    #allocation6 [shape = 's32[1]{0}', space=sflag, size = 0x4, scoped, tag = 'scoped memory for lstm_cnn_forward.1']
    %15 = vsyncpa [#allocation4], 0
    %16 = vsyncpa [#allocation6], 0
    // Predicated region
    $region2: #{lstm_cnn_forward.1} parent=1 // pred_check
      _
    $region3: #{lstm_cnn_forward.1} parent=1 // pred_check_branch
      %18 = sbr.rel (0) target = $region5
    $region4: #{lstm_cnn_forward.1} parent=1 // pred_region
      _
    $region5: #{lstm_cnn_forward.1} parent=1 // pred_fallthru
      _
    // Predicated region
    $region6: #{lstm_cnn_forward.1} parent=1 // pred_check
      _
    $region7: #{lstm_cnn_forward.1} parent=1 // pred_check_branch
      %20 = sbr.rel (0) target = $region9
    $region8: #{lstm_cnn_forward.1} parent=1 // pred_region
      _
    $region9: #{lstm_cnn_forward.1} parent=1 // pred_fallthru
      _
    // Predicated region
    $region10: #{lstm_cnn_forward.1} parent=1 // pred_check
      _
    $region11: #{lstm_cnn_forward.1} parent=1 // pred_check_branch
      %22 = sbr.rel (0) target = $region13
    $region12: #{lstm_cnn_forward.1} parent=1 // pred_region
      %s24 = ssub.s32 1024, 1024
      %25 = vsyncadd [#allocation4], %s24
      %s26 = sshll.u32 [#allocation3], 4
      %s27 = int_to_ptr.vmem [resolvable:$true] %s26
      %32 = dma.hbm_to_vmem [thread:$0]  %s2, 1024, %s27, [#allocation4], 128, 128, 8
    $region13: #{lstm_cnn_forward.1} parent=1 // pred_fallthru
      _
    // Predicated region
    $region14: #{lstm_cnn_forward.1} parent=1 // pred_check
      _
    $region15: #{lstm_cnn_forward.1} parent=1 // pred_check_branch
      %34 = sbr.rel (0) target = $region17
    $region16: #{lstm_cnn_forward.1} parent=1 // pred_region
      _
    $region17: #{lstm_cnn_forward.1} parent=1 // pred_fallthru
      _
    // Predicated region
    $region18: #{lstm_cnn_forward.1} parent=1 // pred_check
      _
    $region19: #{lstm_cnn_forward.1} parent=1 // pred_check_branch
      %36 = sbr.rel (0) target = $region21
    $region20: #{lstm_cnn_forward.1} parent=1 // pred_region
      %s38 = ssub.s32 2048, 2048
      %39 = vsyncadd [#allocation6], %s38
      %s40 = sshll.u32 [#allocation5], 4
      %s41 = int_to_ptr.vmem [resolvable:$true] %s40
      %46 = dma.hbm_to_vmem [thread:$0]  %s4, 2048, %s41, [#allocation6], 128, 128, 8
    $region21: #{lstm_cnn_forward.1} parent=1 // pred_fallthru
      _
    // Predicated region
    $region22: #{lstm_cnn_forward.1} parent=1 // pred_check
      _
    $region23: #{lstm_cnn_forward.1} parent=1 // pred_check_branch
      %48 = sbr.rel (0) target = $region25
    $region24: #{lstm_cnn_forward.1} parent=1 // pred_region
      _
    $region25: #{lstm_cnn_forward.1} parent=1 // pred_fallthru
      _
    // Predicated region
    $region26: #{lstm_cnn_forward.1} parent=1 // pred_check
      _
    $region27: #{lstm_cnn_forward.1} parent=1 // pred_check_branch
      %50 = sbr.rel (0) target = $region29
    $region28: #{lstm_cnn_forward.1} parent=1 // pred_region
      _
    $region29: #{lstm_cnn_forward.1} parent=1 // pred_fallthru
      _
    // Predicated region
    $region30: #{lstm_cnn_forward.1} parent=1 // pred_check
      _
    $region31: #{lstm_cnn_forward.1} parent=1 // pred_check_branch
      %52 = sbr.rel (0) target = $region33
    $region32: #{lstm_cnn_forward.1} parent=1 // pred_region
      _
    $region33: #{lstm_cnn_forward.1} parent=1 // pred_fallthru
      _
    // Predicated region
    $region34: #{lstm_cnn_forward.1} parent=1 // pred_check
      _
    $region35: #{lstm_cnn_forward.1} parent=1 // pred_check_branch
      %54 = sbr.rel (0) target = $region37
    $region36: #{lstm_cnn_forward.1} parent=1 // pred_region
      %55 = dma.done [#allocation4], 1024
    $region37: #{lstm_cnn_forward.1} parent=1 // pred_fallthru
      _
    // Predicated region
    $region38: #{lstm_cnn_forward.1} parent=1 // pred_check
      _
    $region39: #{lstm_cnn_forward.1} parent=1 // pred_check_branch
      %57 = sbr.rel (0) target = $region41
    $region40: #{lstm_cnn_forward.1} parent=1 // pred_region
      %58 = dma.done [#allocation6], 2048
    $region41: #{lstm_cnn_forward.1} parent=1 // pred_fallthru
      _
    %v60 = vld [vmem:[%s0] sm:$0xf]
    %v61 = vld [vmem:[%s0 + $0x4] sm:$0xf]
    %v62 = vld [vmem:[%s1] sm:$0xff]
    %v63 = vld [vmem:[%s1 + $0x8] sm:$0xff]
    %v64 = vld [vmem:[%s3] sm:$0x3]
    %v66 = vlaneseq
    %v67 = vshrl.u32 %v66, 7
    %v68 = vsub.s32 0, %v67
    %v69 = vrot.slane %v64, %v68
    %v70 = vlaneseq
    %v71 = vshrl.u32 %v70, 7
    %v72 = vsub.s32 1, %v71
    %v73 = vrot.slane %v64, %v72
    %v78 = vunpack.c.l.b16 %v60
    %v79 = vunpack.c.l.b16 %v61
    %v80 = vpack.c.b16 %v79, %v78
    %v83 = vunpack.c.l.b16 %v62
    %v84 = vunpack.c.h.b16 %v62
    %v85 = vunpack.c.l.b16 %v63
    %v86 = vunpack.c.h.b16 %v63
    %v87 = vpack.c.b16 %v85, %v83
    %v88 = vpack.c.b16 %v86, %v84
    %vm91 = vcmask 130048
    %v93 = vsel %vm91, %v80, 0
    %95 = vmatprep.subr.bf16.mxu0 0
    %96 = vmatpush1.bf16.msra.mxu0 0
    %97 = vmatprep.subr.bf16.mxu0 0
    %98 = vmatpush1.bf16.msra.mxu0 0
    %99 = vmatprep.subr.bf16.mxu0 0
    %100 = vmatpush1.bf16.msra.mxu0 0
    %101 = vmatprep.subr.bf16.mxu0 0
    %102 = vmatpush1.bf16.msra.mxu0 0
    %103 = vmatprep.subr.bf16.mxu0 0
    %104 = vmatpush1.bf16.msra.mxu0 0
    %105 = vmatprep.subr.bf16.mxu0 0
    %106 = vmatpush1.bf16.msra.mxu0 0
    %107 = vmatprep.subr.bf16.mxu0 0
    %108 = vmatpush1.bf16.msra.mxu0 0
    %109 = vmatprep.subr.bf16.mxu0 %v88
    %110 = vmatpush1.bf16.msra.mxu0 %v87
    %111 = vmatprep.subr.bf16.mxu0 0
    %112 = vmatpush2.bf16.msra.mxu0 0
    %113 = vmatprep.subr.bf16.mxu0 0
    %114 = vmatpush2.bf16.msra.mxu0 0
    %115 = vmatprep.subr.bf16.mxu0 0
    %116 = vmatpush2.bf16.msra.mxu0 0
    %117 = vmatprep.subr.bf16.mxu0 0
    %118 = vmatpush2.bf16.msra.mxu0 0
    %119 = vmatprep.subr.bf16.mxu0 0
    %120 = vmatpush2.bf16.msra.mxu0 0
    %121 = vmatprep.subr.bf16.mxu0 0
    %122 = vmatpush2.bf16.msra.mxu0 0
    %123 = vmatprep.subr.bf16.mxu0 0
    %124 = vmatpush2.bf16.msra.mxu0 0
    %125 = vmatprep.subr.bf16.mxu0 0
    %126 = vmatpush2.bf16.msra.mxu0 0
    %127 = vmatprep.mubr.bf16.mxu0 0
    %128 = vmatmul.mubr.bf16.gmra.mxu0 %v93
    %v129 = vpop.f32.mrf.mxu0
    %v130 = vadd.f32 %v69, %v129
    %v131 = vpop.f32.mrf.mxu0
    %v132 = vadd.f32 %v73, %v131
    %v133 = vpop.f32.mrf.mxu0
    %v134 = vadd.f32 %v69, %v133
    %v135 = vpop.f32.mrf.mxu0
    %v136 = vadd.f32 %v73, %v135
    %137 = vdwg.mxu0
    %v138 = vld [vmem:[%s5] sm:$0x3]
    %v139 = vld [vmem:[%s6] sm:$0xff]
    %v140 = vxor.u32 %v130, 2147483648
    %v141 = vxor.u32 %v132, 2147483648
    %v142 = vxor.u32 %v134, 2147483648
    %v143 = vxor.u32 %v136, 2147483648
    %v144 = vmul.f32 %v140, 1.442695
    %v145 = vpow.pop %v144
    %v146 = vmul.f32 %v141, 1.442695
    %v147 = vpow.pop %v146
    %v148 = vmul.f32 %v142, 1.442695
    %v149 = vpow.pop %v148
    %v150 = vmul.f32 %v143, 1.442695
    %v151 = vpow.pop %v150
    %v152 = vadd.f32 %v145, 1.0
    %v153 = vadd.f32 %v147, 1.0
    %v154 = vadd.f32 %v149, 1.0
    %v155 = vadd.f32 %v151, 1.0
    %v156 = vrcp.pop %v152
    %v157 = vmul.f32 1.0, %v156
    %v158 = vrcp.pop %v153
    %v159 = vmul.f32 1.0, %v158
    %v160 = vrcp.pop %v154
    %v161 = vmul.f32 1.0, %v160
    %v162 = vrcp.pop %v155
    %v163 = vmul.f32 1.0, %v162
    %v164 = vmul.f32 %v159, 2.0
    %v165 = vmul.f32 %v163, 2.0
    %v166 = vsub.f32 %v164, 1.0
    %v167 = vsub.f32 %v165, 1.0
    %v168 = vmul.f32 %v157, 0.0
    %v169 = vmul.f32 %v161, 0.0
    %v170 = vmul.f32 %v157, %v166
    %v171 = vmul.f32 %v161, %v167
    %174 = vrot.lane.b32.xlu0 %v170, 64
    %v175 = vpop.permute.xlu0 %174
    %176 = vrot.lane.b32.xlu0 %v171, 64
    %v177 = vpop.permute.xlu0 %176
    %v180 = vadd.f32 %v168, %v175
    %v181 = vadd.f32 %v169, %v177
    %v182 = vtanh.pop %v180
    %v183 = vtanh.pop %v181
    %v184 = vmul.f32 %v159, %v182
    %v185 = vmul.f32 %v163, %v183
    %v188 = vrot.slane %v185, 7
    %vm189 = vcmask 1041409
    %v190 = vsel %vm189, %v188, %v184
    %191 = vrot.lane.b32.xlu0 %v190, 64
    %v192 = vpop.permute.xlu0 %191
    %vm194 = vcmask 523264
    %v195 = vsel %vm194, %v192, 0.0
    %v196 = vpack.c.bf16 %v195, %v195
    %v197 = vld [vmem:[#allocation5] sm:$0xff]
    %v198 = vld [vmem:[#allocation5 + $0x8] sm:$0xff]
    %v199 = vld [vmem:[#allocation5 + $0x10] sm:$0xff]
    %v200 = vld [vmem:[#allocation5 + $0x18] sm:$0xff]
    %v201 = vld [vmem:[#allocation5 + $0x20] sm:$0xff]
    %v202 = vld [vmem:[#allocation5 + $0x28] sm:$0xff]
    %v203 = vld [vmem:[#allocation5 + $0x30] sm:$0xff]
    %v204 = vld [vmem:[#allocation5 + $0x38] sm:$0xff]
    %v205 = vld [vmem:[#allocation5 + $0x40] sm:$0xff]
    %v206 = vld [vmem:[#allocation5 + $0x48] sm:$0xff]
    %v207 = vld [vmem:[#allocation5 + $0x50] sm:$0xff]
    %v208 = vld [vmem:[#allocation5 + $0x58] sm:$0xff]
    %v209 = vld [vmem:[#allocation5 + $0x60] sm:$0xff]
    %v210 = vld [vmem:[#allocation5 + $0x68] sm:$0xff]
    %v211 = vld [vmem:[#allocation5 + $0x70] sm:$0xff]
    %v212 = vld [vmem:[#allocation5 + $0x78] sm:$0xff]
    %v214 = vlaneseq
    %v215 = vshrl.u32 %v214, 7
    %v216 = vsub.s32 0, %v215
    %v217 = vrot.slane %v138, %v216
    %v218 = vlaneseq
    %v219 = vshrl.u32 %v218, 7
    %v220 = vsub.s32 1, %v219
    %v221 = vrot.slane %v138, %v220
    %v240 = vunpack.c.l.b16 %v197
    %v241 = vunpack.c.h.b16 %v197
    %v242 = vunpack.c.l.b16 %v198
    %v243 = vunpack.c.h.b16 %v198
    %v244 = vunpack.c.l.b16 %v199
    %v245 = vunpack.c.h.b16 %v199
    %v246 = vunpack.c.l.b16 %v200
    %v247 = vunpack.c.h.b16 %v200
    %v248 = vunpack.c.l.b16 %v201
    %v249 = vunpack.c.h.b16 %v201
    %v250 = vunpack.c.l.b16 %v202
    %v251 = vunpack.c.h.b16 %v202
    %v252 = vunpack.c.l.b16 %v203
    %v253 = vunpack.c.h.b16 %v203
    %v254 = vunpack.c.l.b16 %v204
    %v255 = vunpack.c.h.b16 %v204
    %v256 = vunpack.c.l.b16 %v205
    %v257 = vunpack.c.h.b16 %v205
    %v258 = vunpack.c.l.b16 %v206
    %v259 = vunpack.c.h.b16 %v206
    %v260 = vunpack.c.l.b16 %v207
    %v261 = vunpack.c.h.b16 %v207
    %v262 = vunpack.c.l.b16 %v208
    %v263 = vunpack.c.h.b16 %v208
    %v264 = vunpack.c.l.b16 %v209
    %v265 = vunpack.c.h.b16 %v209
    %v266 = vunpack.c.l.b16 %v210
    %v267 = vunpack.c.h.b16 %v210
    %v268 = vunpack.c.l.b16 %v211
    %v269 = vunpack.c.h.b16 %v211
    %v270 = vunpack.c.l.b16 %v212
    %v271 = vunpack.c.h.b16 %v212
    %v272 = vpack.c.b16 %v242, %v240
    %v273 = vpack.c.b16 %v243, %v241
    %v274 = vpack.c.b16 %v246, %v244
    %v275 = vpack.c.b16 %v247, %v245
    %v276 = vpack.c.b16 %v250, %v248
    %v277 = vpack.c.b16 %v251, %v249
    %v278 = vpack.c.b16 %v254, %v252
    %v279 = vpack.c.b16 %v255, %v253
    %v280 = vpack.c.b16 %v258, %v256
    %v281 = vpack.c.b16 %v259, %v257
    %v282 = vpack.c.b16 %v262, %v260
    %v283 = vpack.c.b16 %v263, %v261
    %v284 = vpack.c.b16 %v266, %v264
    %v285 = vpack.c.b16 %v267, %v265
    %v286 = vpack.c.b16 %v270, %v268
    %v287 = vpack.c.b16 %v271, %v269
    %304 = vmatprep.subr.bf16.mxu0 %v287
    %305 = vmatpush1.bf16.msra.mxu0 %v286
    %306 = vmatprep.subr.bf16.mxu0 %v285
    %307 = vmatpush1.bf16.msra.mxu0 %v284
    %308 = vmatprep.subr.bf16.mxu0 %v283
    %309 = vmatpush1.bf16.msra.mxu0 %v282
    %310 = vmatprep.subr.bf16.mxu0 %v281
    %311 = vmatpush1.bf16.msra.mxu0 %v280
    %312 = vmatprep.subr.bf16.mxu0 %v279
    %313 = vmatpush1.bf16.msra.mxu0 %v278
    %314 = vmatprep.subr.bf16.mxu0 %v277
    %315 = vmatpush1.bf16.msra.mxu0 %v276
    %316 = vmatprep.subr.bf16.mxu0 %v275
    %317 = vmatpush1.bf16.msra.mxu0 %v274
    %318 = vmatprep.subr.bf16.mxu0 %v273
    %319 = vmatpush1.bf16.msra.mxu0 %v272
    %320 = vmatprep.subr.bf16.mxu0 0
    %321 = vmatpush2.bf16.msra.mxu0 0
    %322 = vmatprep.subr.bf16.mxu0 0
    %323 = vmatpush2.bf16.msra.mxu0 0
    %324 = vmatprep.subr.bf16.mxu0 0
    %325 = vmatpush2.bf16.msra.mxu0 0
    %326 = vmatprep.subr.bf16.mxu0 0
    %327 = vmatpush2.bf16.msra.mxu0 0
    %328 = vmatprep.subr.bf16.mxu0 0
    %329 = vmatpush2.bf16.msra.mxu0 0
    %330 = vmatprep.subr.bf16.mxu0 0
    %331 = vmatpush2.bf16.msra.mxu0 0
    %332 = vmatprep.subr.bf16.mxu0 0
    %333 = vmatpush2.bf16.msra.mxu0 0
    %334 = vmatprep.subr.bf16.mxu0 0
    %335 = vmatpush2.bf16.msra.mxu0 0
    %336 = vmatprep.mubr.bf16.mxu0 0
    %337 = vmatmul.mubr.bf16.gmra.mxu0 %v196
    %v338 = vpop.f32.mrf.mxu0
    %v339 = vadd.f32 %v217, %v338
    %v340 = vpop.f32.mrf.mxu0
    %v341 = vadd.f32 %v221, %v340
    %v342 = vpop.f32.mrf.mxu0
    %v343 = vpop.f32.mrf.mxu0
    %344 = vdwg.mxu0
    %v345 = vxor.u32 %v339, 2147483648
    %v346 = vxor.u32 %v341, 2147483648
    %v347 = vmul.f32 %v345, 1.442695
    %v348 = vpow.pop %v347
    %v349 = vmul.f32 %v346, 1.442695
    %v350 = vpow.pop %v349
    %v351 = vadd.f32 %v348, 1.0
    %v352 = vadd.f32 %v350, 1.0
    %v353 = vrcp.pop %v351
    %v354 = vmul.f32 1.0, %v353
    %v355 = vrcp.pop %v352
    %v356 = vmul.f32 1.0, %v355
    %v357 = vmul.f32 %v356, 2.0
    %v358 = vsub.f32 %v357, 1.0
    %v359 = vmul.f32 %v354, 0.0
    %v360 = vmul.f32 %v354, %v358
    %362 = vrot.lane.b32.xlu0 %v360, 64
    %v363 = vpop.permute.xlu0 %362
    %v365 = vadd.f32 %v359, %v363
    %v366 = vtanh.pop %v365
    %v367 = vmul.f32 %v356, %v366
    %v368 = vlaneseq
    %v369 = vshrl.u32 %v368, 7
    %v370 = vsub.s32 0, %v369
    %v371 = vrot.slane %v139, %v370
    %373 = vrot.lane.b32.xlu0 %v371, 64
    %v374 = vpop.permute.xlu0 %373
    %v376 = vmul.f32 %v367, %v374
    %v377 = vadd.f32 %v376, 0.0
    %v378 = vpack.c.bf16 %v184, %v184
    %v379 = vpack.c.bf16 %v185, %v185
    %v380 = vld [vmem:[#allocation3] sm:$0xff]
    %v381 = vld [vmem:[#allocation3 + $0x8] sm:$0xff]
    %v382 = vld [vmem:[#allocation3 + $0x10] sm:$0xff]
    %v383 = vld [vmem:[#allocation3 + $0x18] sm:$0xff]
    %v384 = vld [vmem:[#allocation3 + $0x20] sm:$0xff]
    %v385 = vld [vmem:[#allocation3 + $0x28] sm:$0xff]
    %v386 = vld [vmem:[#allocation3 + $0x30] sm:$0xff]
    %v387 = vld [vmem:[#allocation3 + $0x38] sm:$0xff]
    %v390 = vunpack.c.l.b16 %v378
    %v391 = vunpack.c.l.b16 %v379
    %v392 = vrot.slane %v391, 7
    %v393 = vsel %vm189, %v392, %v390
    %v394 = vpack.c.b16 %v393, %v393
    %395 = vrot.lane.b32.xlu0 %v394, 64
    %v396 = vpop.permute.xlu0 %395
    %v405 = vunpack.c.l.b16 %v380
    %v406 = vunpack.c.h.b16 %v380
    %v407 = vunpack.c.l.b16 %v381
    %v408 = vunpack.c.h.b16 %v381
    %v409 = vunpack.c.l.b16 %v382
    %v410 = vunpack.c.h.b16 %v382
    %v411 = vunpack.c.l.b16 %v383
    %v412 = vunpack.c.h.b16 %v383
    %v413 = vunpack.c.l.b16 %v384
    %v414 = vunpack.c.h.b16 %v384
    %v415 = vunpack.c.l.b16 %v385
    %v416 = vunpack.c.h.b16 %v385
    %v417 = vunpack.c.l.b16 %v386
    %v418 = vunpack.c.h.b16 %v386
    %v419 = vunpack.c.l.b16 %v387
    %v420 = vunpack.c.h.b16 %v387
    %v421 = vpack.c.b16 %v407, %v405
    %v422 = vpack.c.b16 %v408, %v406
    %v423 = vpack.c.b16 %v411, %v409
    %v424 = vpack.c.b16 %v412, %v410
    %v425 = vpack.c.b16 %v415, %v413
    %v426 = vpack.c.b16 %v416, %v414
    %v427 = vpack.c.b16 %v419, %v417
    %v428 = vpack.c.b16 %v420, %v418
    %v438 = vsel %vm194, %v396, 0
    %440 = vmatprep.subr.bf16.mxu0 0
    %441 = vmatpush1.bf16.msra.mxu0 0
    %442 = vmatprep.subr.bf16.mxu0 0
    %443 = vmatpush1.bf16.msra.mxu0 0
    %444 = vmatprep.subr.bf16.mxu0 0
    %445 = vmatpush1.bf16.msra.mxu0 0
    %446 = vmatprep.subr.bf16.mxu0 0
    %447 = vmatpush1.bf16.msra.mxu0 0
    %448 = vmatprep.subr.bf16.mxu0 %v428
    %449 = vmatpush1.bf16.msra.mxu0 %v427
    %450 = vmatprep.subr.bf16.mxu0 %v426
    %451 = vmatpush1.bf16.msra.mxu0 %v425
    %452 = vmatprep.subr.bf16.mxu0 %v424
    %453 = vmatpush1.bf16.msra.mxu0 %v423
    %454 = vmatprep.subr.bf16.mxu0 %v422
    %455 = vmatpush1.bf16.msra.mxu0 %v421
    %456 = vmatprep.subr.bf16.mxu0 0
    %457 = vmatpush2.bf16.msra.mxu0 0
    %458 = vmatprep.subr.bf16.mxu0 0
    %459 = vmatpush2.bf16.msra.mxu0 0
    %460 = vmatprep.subr.bf16.mxu0 0
    %461 = vmatpush2.bf16.msra.mxu0 0
    %462 = vmatprep.subr.bf16.mxu0 0
    %463 = vmatpush2.bf16.msra.mxu0 0
    %464 = vmatprep.subr.bf16.mxu0 0
    %465 = vmatpush2.bf16.msra.mxu0 0
    %466 = vmatprep.subr.bf16.mxu0 0
    %467 = vmatpush2.bf16.msra.mxu0 0
    %468 = vmatprep.subr.bf16.mxu0 0
    %469 = vmatpush2.bf16.msra.mxu0 0
    %470 = vmatprep.subr.bf16.mxu0 0
    %471 = vmatpush2.bf16.msra.mxu0 0
    %472 = vmatprep.mubr.bf16.mxu0 0
    %473 = vmatmul.mubr.bf16.gmra.mxu0 %v438
    %v474 = vpop.f32.mrf.mxu0
    %v475 = vadd.f32 0.0, %v474
    %v476 = vpop.f32.mrf.mxu0
    %v477 = vadd.f32 0.0, %v476
    %v478 = vpop.f32.mrf.mxu0
    %v479 = vpop.f32.mrf.mxu0
    %480 = vdwg.mxu0
    %v483 = vrot.slane %v475, 7
    %v484 = vrot.slane %v477, 7
    %v489 = vadd.f32 %v130, %v483
    %v490 = vadd.f32 %v132, %v484
    %v491 = vadd.f32 %v134, %v475
    %v492 = vadd.f32 %v136, %v477
    %v493 = vxor.u32 %v489, 2147483648
    %v494 = vxor.u32 %v490, 2147483648
    %v495 = vxor.u32 %v491, 2147483648
    %v496 = vxor.u32 %v492, 2147483648
    %v497 = vmul.f32 %v493, 1.442695
    %v498 = vpow.pop %v497
    %v499 = vmul.f32 %v494, 1.442695
    %v500 = vpow.pop %v499
    %v501 = vmul.f32 %v495, 1.442695
    %v502 = vpow.pop %v501
    %v503 = vmul.f32 %v496, 1.442695
    %v504 = vpow.pop %v503
    %v505 = vadd.f32 %v498, 1.0
    %v506 = vadd.f32 %v500, 1.0
    %v507 = vadd.f32 %v502, 1.0
    %v508 = vadd.f32 %v504, 1.0
    %v509 = vrcp.pop %v505
    %v510 = vmul.f32 1.0, %v509
    %v511 = vrcp.pop %v506
    %v512 = vmul.f32 1.0, %v511
    %v513 = vrcp.pop %v507
    %v514 = vmul.f32 1.0, %v513
    %v515 = vrcp.pop %v508
    %v516 = vmul.f32 1.0, %v515
    %v517 = vmul.f32 %v512, 2.0
    %v518 = vmul.f32 %v516, 2.0
    %v519 = vsub.f32 %v517, 1.0
    %v520 = vsub.f32 %v518, 1.0
    %v523 = vrot.slane %v180, 7
    %v524 = vrot.slane %v181, 7
    %v527 = vmul.f32 %v510, %v523
    %v528 = vmul.f32 %v514, %v524
    %v529 = vmul.f32 %v510, %v519
    %v530 = vmul.f32 %v514, %v520
    %533 = vrot.lane.b32.xlu0 %v529, 64
    %v534 = vpop.permute.xlu0 %533
    %535 = vrot.lane.b32.xlu0 %v530, 64
    %v536 = vpop.permute.xlu0 %535
    %v539 = vadd.f32 %v527, %v534
    %v540 = vadd.f32 %v528, %v536
    %v541 = vtanh.pop %v539
    %v542 = vtanh.pop %v540
    %v543 = vmul.f32 %v512, %v541
    %v544 = vmul.f32 %v516, %v542
    %v547 = vrot.slane %v544, 7
    %vm548 = vcmask 1042434
    %v549 = vsel %vm548, %v547, %v543
    %550 = vrot.lane.b32.xlu0 %v549, 64
    %v551 = vpop.permute.xlu0 %550
    %v554 = vrot.slane %v367, 7
    %v556 = vsel %vm194, %v551, %v554
    %v557 = vpack.c.bf16 %v556, %v556
    %v559 = vshrl.u32 %v557, 16
    %v561 = vshll.u32 %v557, 16
    %v563 = vrot.slane %v561, 1
    %v564 = vor.u32 %v559, %v563
    %566 = vmatprep.subr.bf16.mxu0 %v287
    %567 = vmatpush1.bf16.msra.mxu0 %v286
    %568 = vmatprep.subr.bf16.mxu0 %v285
    %569 = vmatpush1.bf16.msra.mxu0 %v284
    %570 = vmatprep.subr.bf16.mxu0 %v283
    %571 = vmatpush1.bf16.msra.mxu0 %v282
    %572 = vmatprep.subr.bf16.mxu0 %v281
    %573 = vmatpush1.bf16.msra.mxu0 %v280
    %574 = vmatprep.subr.bf16.mxu0 %v279
    %575 = vmatpush1.bf16.msra.mxu0 %v278
    %576 = vmatprep.subr.bf16.mxu0 %v277
    %577 = vmatpush1.bf16.msra.mxu0 %v276
    %578 = vmatprep.subr.bf16.mxu0 %v275
    %579 = vmatpush1.bf16.msra.mxu0 %v274
    %580 = vmatprep.subr.bf16.mxu0 %v273
    %581 = vmatpush1.bf16.msra.mxu0 %v272
    %582 = vmatprep.subr.bf16.mxu0 0
    %583 = vmatpush2.bf16.msra.mxu0 0
    %584 = vmatprep.subr.bf16.mxu0 0
    %585 = vmatpush2.bf16.msra.mxu0 0
    %586 = vmatprep.subr.bf16.mxu0 0
    %587 = vmatpush2.bf16.msra.mxu0 0
    %588 = vmatprep.subr.bf16.mxu0 0
    %589 = vmatpush2.bf16.msra.mxu0 0
    %590 = vmatprep.subr.bf16.mxu0 0
    %591 = vmatpush2.bf16.msra.mxu0 0
    %592 = vmatprep.subr.bf16.mxu0 0
    %593 = vmatpush2.bf16.msra.mxu0 0
    %594 = vmatprep.subr.bf16.mxu0 0
    %595 = vmatpush2.bf16.msra.mxu0 0
    %596 = vmatprep.subr.bf16.mxu0 0
    %597 = vmatpush2.bf16.msra.mxu0 0
    %598 = vmatprep.mubr.bf16.mxu0 0
    %599 = vmatmul.mubr.bf16.gmra.mxu0 %v564
    %v600 = vpop.f32.mrf.mxu0
    %v601 = vadd.f32 %v217, %v600
    %v602 = vpop.f32.mrf.mxu0
    %v603 = vadd.f32 %v221, %v602
    %v604 = vpop.f32.mrf.mxu0
    %v605 = vpop.f32.mrf.mxu0
    %606 = vdwg.mxu0
    %v607 = vxor.u32 %v601, 2147483648
    %v608 = vxor.u32 %v603, 2147483648
    %v609 = vmul.f32 %v607, 1.442695
    %v610 = vpow.pop %v609
    %v611 = vmul.f32 %v608, 1.442695
    %v612 = vpow.pop %v611
    %v613 = vadd.f32 %v610, 1.0
    %v614 = vadd.f32 %v612, 1.0
    %v615 = vrcp.pop %v613
    %v616 = vmul.f32 1.0, %v615
    %v617 = vrcp.pop %v614
    %v618 = vmul.f32 1.0, %v617
    %v619 = vmul.f32 %v618, 2.0
    %v620 = vsub.f32 %v619, 1.0
    %v621 = vmul.f32 %v616, %v365
    %v622 = vmul.f32 %v616, %v620
    %624 = vrot.lane.b32.xlu0 %v622, 64
    %v625 = vpop.permute.xlu0 %624
    %v627 = vadd.f32 %v621, %v625
    %v628 = vtanh.pop %v627
    %v629 = vmul.f32 %v618, %v628
    %v630 = vlaneseq
    %v631 = vshrl.u32 %v630, 7
    %v632 = vsub.s32 1, %v631
    %v633 = vrot.slane %v139, %v632
    %635 = vrot.lane.b32.xlu0 %v633, 64
    %v636 = vpop.permute.xlu0 %635
    %v638 = vmul.f32 %v629, %v636
    %v639 = vadd.f32 %v377, %v638
    %v640 = vpack.c.bf16 %v543, %v543
    %v641 = vpack.c.bf16 %v544, %v544
    %v644 = vunpack.c.l.b16 %v640
    %v645 = vunpack.c.l.b16 %v641
    %v646 = vrot.slane %v644, 1
    %v647 = vsel %vm189, %v645, %v646
    %v648 = vpack.c.b16 %v647, %v647
    %649 = vrot.lane.b32.xlu0 %v648, 64
    %v650 = vpop.permute.xlu0 %649
    %v652 = vsel %vm194, %v650, 0
    %654 = vmatprep.subr.bf16.mxu0 0
    %655 = vmatpush1.bf16.msra.mxu0 0
    %656 = vmatprep.subr.bf16.mxu0 0
    %657 = vmatpush1.bf16.msra.mxu0 0
    %658 = vmatprep.subr.bf16.mxu0 0
    %659 = vmatpush1.bf16.msra.mxu0 0
    %660 = vmatprep.subr.bf16.mxu0 0
    %661 = vmatpush1.bf16.msra.mxu0 0
    %662 = vmatprep.subr.bf16.mxu0 %v428
    %663 = vmatpush1.bf16.msra.mxu0 %v427
    %664 = vmatprep.subr.bf16.mxu0 %v426
    %665 = vmatpush1.bf16.msra.mxu0 %v425
    %666 = vmatprep.subr.bf16.mxu0 %v424
    %667 = vmatpush1.bf16.msra.mxu0 %v423
    %668 = vmatprep.subr.bf16.mxu0 %v422
    %669 = vmatpush1.bf16.msra.mxu0 %v421
    %670 = vmatprep.subr.bf16.mxu0 0
    %671 = vmatpush2.bf16.msra.mxu0 0
    %672 = vmatprep.subr.bf16.mxu0 0
    %673 = vmatpush2.bf16.msra.mxu0 0
    %674 = vmatprep.subr.bf16.mxu0 0
    %675 = vmatpush2.bf16.msra.mxu0 0
    %676 = vmatprep.subr.bf16.mxu0 0
    %677 = vmatpush2.bf16.msra.mxu0 0
    %678 = vmatprep.subr.bf16.mxu0 0
    %679 = vmatpush2.bf16.msra.mxu0 0
    %680 = vmatprep.subr.bf16.mxu0 0
    %681 = vmatpush2.bf16.msra.mxu0 0
    %682 = vmatprep.subr.bf16.mxu0 0
    %683 = vmatpush2.bf16.msra.mxu0 0
    %684 = vmatprep.subr.bf16.mxu0 0
    %685 = vmatpush2.bf16.msra.mxu0 0
    %686 = vmatprep.mubr.bf16.mxu0 0
    %687 = vmatmul.mubr.bf16.gmra.mxu0 %v652
    %v688 = vpop.f32.mrf.mxu0
    %v689 = vadd.f32 0.0, %v688
    %v690 = vpop.f32.mrf.mxu0
    %v691 = vadd.f32 0.0, %v690
    %v692 = vpop.f32.mrf.mxu0
    %v693 = vpop.f32.mrf.mxu0
    %694 = vdwg.mxu0
    %v697 = vrot.slane %v689, 6
    %v698 = vrot.slane %v691, 6
    %v699 = vrot.slane %v689, 7
    %v700 = vrot.slane %v691, 7
    %v705 = vadd.f32 %v130, %v697
    %v706 = vadd.f32 %v132, %v698
    %v707 = vadd.f32 %v134, %v699
    %v708 = vadd.f32 %v136, %v700
    %v709 = vxor.u32 %v705, 2147483648
    %v710 = vxor.u32 %v706, 2147483648
    %v711 = vxor.u32 %v707, 2147483648
    %v712 = vxor.u32 %v708, 2147483648
    %v713 = vmul.f32 %v709, 1.442695
    %v714 = vpow.pop %v713
    %v715 = vmul.f32 %v710, 1.442695
    %v716 = vpow.pop %v715
    %v717 = vmul.f32 %v711, 1.442695
    %v718 = vpow.pop %v717
    %v719 = vmul.f32 %v712, 1.442695
    %v720 = vpow.pop %v719
    %v721 = vadd.f32 %v714, 1.0
    %v722 = vadd.f32 %v716, 1.0
    %v723 = vadd.f32 %v718, 1.0
    %v724 = vadd.f32 %v720, 1.0
    %v725 = vrcp.pop %v721
    %v726 = vmul.f32 1.0, %v725
    %v727 = vrcp.pop %v722
    %v728 = vmul.f32 1.0, %v727
    %v729 = vrcp.pop %v723
    %v730 = vmul.f32 1.0, %v729
    %v731 = vrcp.pop %v724
    %v732 = vmul.f32 1.0, %v731
    %v733 = vmul.f32 %v728, 2.0
    %v734 = vmul.f32 %v732, 2.0
    %v735 = vsub.f32 %v733, 1.0
    %v736 = vsub.f32 %v734, 1.0
    %v739 = vrot.slane %v539, 7
    %v740 = vrot.slane %v540, 7
    %v743 = vmul.f32 %v726, %v739
    %v744 = vmul.f32 %v730, %v740
    %v745 = vmul.f32 %v726, %v735
    %v746 = vmul.f32 %v730, %v736
    %749 = vrot.lane.b32.xlu0 %v745, 64
    %v750 = vpop.permute.xlu0 %749
    %751 = vrot.lane.b32.xlu0 %v746, 64
    %v752 = vpop.permute.xlu0 %751
    %v755 = vadd.f32 %v743, %v750
    %v756 = vadd.f32 %v744, %v752
    %v757 = vtanh.pop %v755
    %v758 = vtanh.pop %v756
    %v759 = vmul.f32 %v728, %v757
    %v760 = vmul.f32 %v732, %v758
    %v763 = vrot.slane %v760, 7
    %vm764 = vcmask 1043459
    %v765 = vsel %vm764, %v763, %v759
    %766 = vrot.lane.b32.xlu0 %v765, 64
    %v767 = vpop.permute.xlu0 %766
    %v770 = vrot.slane %v629, 6
    %v772 = vsel %vm194, %v767, %v770
    %v773 = vpack.c.bf16 %v772, %v772
    %v775 = vrot.slane %v773, 1
    %777 = vmatprep.subr.bf16.mxu0 %v287
    %778 = vmatpush1.bf16.msra.mxu0 %v286
    %779 = vmatprep.subr.bf16.mxu0 %v285
    %780 = vmatpush1.bf16.msra.mxu0 %v284
    %781 = vmatprep.subr.bf16.mxu0 %v283
    %782 = vmatpush1.bf16.msra.mxu0 %v282
    %783 = vmatprep.subr.bf16.mxu0 %v281
    %784 = vmatpush1.bf16.msra.mxu0 %v280
    %785 = vmatprep.subr.bf16.mxu0 %v279
    %786 = vmatpush1.bf16.msra.mxu0 %v278
    %787 = vmatprep.subr.bf16.mxu0 %v277
    %788 = vmatpush1.bf16.msra.mxu0 %v276
    %789 = vmatprep.subr.bf16.mxu0 %v275
    %790 = vmatpush1.bf16.msra.mxu0 %v274
    %791 = vmatprep.subr.bf16.mxu0 %v273
    %792 = vmatpush1.bf16.msra.mxu0 %v272
    %793 = vmatprep.subr.bf16.mxu0 0
    %794 = vmatpush2.bf16.msra.mxu0 0
    %795 = vmatprep.subr.bf16.mxu0 0
    %796 = vmatpush2.bf16.msra.mxu0 0
    %797 = vmatprep.subr.bf16.mxu0 0
    %798 = vmatpush2.bf16.msra.mxu0 0
    %799 = vmatprep.subr.bf16.mxu0 0
    %800 = vmatpush2.bf16.msra.mxu0 0
    %801 = vmatprep.subr.bf16.mxu0 0
    %802 = vmatpush2.bf16.msra.mxu0 0
    %803 = vmatprep.subr.bf16.mxu0 0
    %804 = vmatpush2.bf16.msra.mxu0 0
    %805 = vmatprep.subr.bf16.mxu0 0
    %806 = vmatpush2.bf16.msra.mxu0 0
    %807 = vmatprep.subr.bf16.mxu0 0
    %808 = vmatpush2.bf16.msra.mxu0 0
    %809 = vmatprep.mubr.bf16.mxu0 0
    %810 = vmatmul.mubr.bf16.gmra.mxu0 %v775
    %v811 = vpop.f32.mrf.mxu0
    %v812 = vadd.f32 %v217, %v811
    %v813 = vpop.f32.mrf.mxu0
    %v814 = vadd.f32 %v221, %v813
    %v815 = vpop.f32.mrf.mxu0
    %v816 = vpop.f32.mrf.mxu0
    %817 = vdwg.mxu0
    %v818 = vxor.u32 %v812, 2147483648
    %v819 = vxor.u32 %v814, 2147483648
    %v820 = vmul.f32 %v818, 1.442695
    %v821 = vpow.pop %v820
    %v822 = vmul.f32 %v819, 1.442695
    %v823 = vpow.pop %v822
    %v824 = vadd.f32 %v821, 1.0
    %v825 = vadd.f32 %v823, 1.0
    %v826 = vrcp.pop %v824
    %v827 = vmul.f32 1.0, %v826
    %v828 = vrcp.pop %v825
    %v829 = vmul.f32 1.0, %v828
    %v830 = vmul.f32 %v829, 2.0
    %v831 = vsub.f32 %v830, 1.0
    %v832 = vmul.f32 %v827, %v627
    %v833 = vmul.f32 %v827, %v831
    %835 = vrot.lane.b32.xlu0 %v833, 64
    %v836 = vpop.permute.xlu0 %835
    %v838 = vadd.f32 %v832, %v836
    %v839 = vtanh.pop %v838
    %v840 = vmul.f32 %v829, %v839
    %v841 = vlaneseq
    %v842 = vshrl.u32 %v841, 7
    %v843 = vsub.s32 2, %v842
    %v844 = vrot.slane %v139, %v843
    %846 = vrot.lane.b32.xlu0 %v844, 64
    %v847 = vpop.permute.xlu0 %846
    %v849 = vmul.f32 %v840, %v847
    %v850 = vadd.f32 %v639, %v849
    %v851 = vpack.c.bf16 %v759, %v759
    %v852 = vpack.c.bf16 %v760, %v760
    %v855 = vunpack.c.l.b16 %v851
    %v856 = vunpack.c.l.b16 %v852
    %v857 = vrot.slane %v855, 2
    %v858 = vrot.slane %v856, 1
    %v859 = vsel %vm189, %v858, %v857
    %v860 = vpack.c.b16 %v859, %v859
    %861 = vrot.lane.b32.xlu0 %v860, 64
    %v862 = vpop.permute.xlu0 %861
    %v864 = vsel %vm194, %v862, 0
    %866 = vmatprep.subr.bf16.mxu0 0
    %867 = vmatpush1.bf16.msra.mxu0 0
    %868 = vmatprep.subr.bf16.mxu0 0
    %869 = vmatpush1.bf16.msra.mxu0 0
    %870 = vmatprep.subr.bf16.mxu0 0
    %871 = vmatpush1.bf16.msra.mxu0 0
    %872 = vmatprep.subr.bf16.mxu0 0
    %873 = vmatpush1.bf16.msra.mxu0 0
    %874 = vmatprep.subr.bf16.mxu0 %v428
    %875 = vmatpush1.bf16.msra.mxu0 %v427
    %876 = vmatprep.subr.bf16.mxu0 %v426
    %877 = vmatpush1.bf16.msra.mxu0 %v425
    %878 = vmatprep.subr.bf16.mxu0 %v424
    %879 = vmatpush1.bf16.msra.mxu0 %v423
    %880 = vmatprep.subr.bf16.mxu0 %v422
    %881 = vmatpush1.bf16.msra.mxu0 %v421
    %882 = vmatprep.subr.bf16.mxu0 0
    %883 = vmatpush2.bf16.msra.mxu0 0
    %884 = vmatprep.subr.bf16.mxu0 0
    %885 = vmatpush2.bf16.msra.mxu0 0
    %886 = vmatprep.subr.bf16.mxu0 0
    %887 = vmatpush2.bf16.msra.mxu0 0
    %888 = vmatprep.subr.bf16.mxu0 0
    %889 = vmatpush2.bf16.msra.mxu0 0
    %890 = vmatprep.subr.bf16.mxu0 0
    %891 = vmatpush2.bf16.msra.mxu0 0
    %892 = vmatprep.subr.bf16.mxu0 0
    %893 = vmatpush2.bf16.msra.mxu0 0
    %894 = vmatprep.subr.bf16.mxu0 0
    %895 = vmatpush2.bf16.msra.mxu0 0
    %896 = vmatprep.subr.bf16.mxu0 0
    %897 = vmatpush2.bf16.msra.mxu0 0
    %898 = vmatprep.mubr.bf16.mxu0 0
    %899 = vmatmul.mubr.bf16.gmra.mxu0 %v864
    %v900 = vpop.f32.mrf.mxu0
    %v901 = vadd.f32 0.0, %v900
    %v902 = vpop.f32.mrf.mxu0
    %v903 = vadd.f32 0.0, %v902
    %v904 = vpop.f32.mrf.mxu0
    %v905 = vpop.f32.mrf.mxu0
    %906 = vdwg.mxu0
    %v909 = vrot.slane %v901, 5
    %v910 = vrot.slane %v903, 5
    %v911 = vrot.slane %v901, 6
    %v912 = vrot.slane %v903, 6
    %v917 = vadd.f32 %v130, %v909
    %v918 = vadd.f32 %v132, %v910
    %v919 = vadd.f32 %v134, %v911
    %v920 = vadd.f32 %v136, %v912
    %v921 = vxor.u32 %v917, 2147483648
    %v922 = vxor.u32 %v918, 2147483648
    %v923 = vxor.u32 %v919, 2147483648
    %v924 = vxor.u32 %v920, 2147483648
    %v925 = vmul.f32 %v921, 1.442695
    %v926 = vpow.pop %v925
    %v927 = vmul.f32 %v922, 1.442695
    %v928 = vpow.pop %v927
    %v929 = vmul.f32 %v923, 1.442695
    %v930 = vpow.pop %v929
    %v931 = vmul.f32 %v924, 1.442695
    %v932 = vpow.pop %v931
    %v933 = vadd.f32 %v926, 1.0
    %v934 = vadd.f32 %v928, 1.0
    %v935 = vadd.f32 %v930, 1.0
    %v936 = vadd.f32 %v932, 1.0
    %v937 = vrcp.pop %v933
    %v938 = vmul.f32 1.0, %v937
    %v939 = vrcp.pop %v934
    %v940 = vmul.f32 1.0, %v939
    %v941 = vrcp.pop %v935
    %v942 = vmul.f32 1.0, %v941
    %v943 = vrcp.pop %v936
    %v944 = vmul.f32 1.0, %v943
    %v945 = vmul.f32 %v940, 2.0
    %v946 = vmul.f32 %v944, 2.0
    %v947 = vsub.f32 %v945, 1.0
    %v948 = vsub.f32 %v946, 1.0
    %v951 = vrot.slane %v755, 7
    %v952 = vrot.slane %v756, 7
    %v955 = vmul.f32 %v938, %v951
    %v956 = vmul.f32 %v942, %v952
    %v957 = vmul.f32 %v938, %v947
    %v958 = vmul.f32 %v942, %v948
    %961 = vrot.lane.b32.xlu0 %v957, 64
    %v962 = vpop.permute.xlu0 %961
    %963 = vrot.lane.b32.xlu0 %v958, 64
    %v964 = vpop.permute.xlu0 %963
    %v967 = vadd.f32 %v955, %v962
    %v968 = vadd.f32 %v956, %v964
    %v969 = vtanh.pop %v967
    %v970 = vtanh.pop %v968
    %v971 = vmul.f32 %v940, %v969
    %v972 = vmul.f32 %v944, %v970
    %v975 = vrot.slane %v972, 7
    %vm976 = vcmask 1044484
    %v977 = vsel %vm976, %v975, %v971
    %978 = vrot.lane.b32.xlu0 %v977, 64
    %v979 = vpop.permute.xlu0 %978
    %v982 = vrot.slane %v840, 5
    %v984 = vsel %vm194, %v979, %v982
    %v985 = vpack.c.bf16 %v984, %v984
    %v987 = vshrl.u32 %v985, 16
    %v989 = vrot.slane %v987, 1
    %v990 = vshll.u32 %v985, 16
    %v992 = vrot.slane %v990, 2
    %v993 = vor.u32 %v989, %v992
    %995 = vmatprep.subr.bf16.mxu0 %v287
    %996 = vmatpush1.bf16.msra.mxu0 %v286
    %997 = vmatprep.subr.bf16.mxu0 %v285
    %998 = vmatpush1.bf16.msra.mxu0 %v284
    %999 = vmatprep.subr.bf16.mxu0 %v283
    %1000 = vmatpush1.bf16.msra.mxu0 %v282
    %1001 = vmatprep.subr.bf16.mxu0 %v281
    %1002 = vmatpush1.bf16.msra.mxu0 %v280
    %1003 = vmatprep.subr.bf16.mxu0 %v279
    %1004 = vmatpush1.bf16.msra.mxu0 %v278
    %1005 = vmatprep.subr.bf16.mxu0 %v277
    %1006 = vmatpush1.bf16.msra.mxu0 %v276
    %1007 = vmatprep.subr.bf16.mxu0 %v275
    %1008 = vmatpush1.bf16.msra.mxu0 %v274
    %1009 = vmatprep.subr.bf16.mxu0 %v273
    %1010 = vmatpush1.bf16.msra.mxu0 %v272
    %1011 = vmatprep.subr.bf16.mxu0 0
    %1012 = vmatpush2.bf16.msra.mxu0 0
    %1013 = vmatprep.subr.bf16.mxu0 0
    %1014 = vmatpush2.bf16.msra.mxu0 0
    %1015 = vmatprep.subr.bf16.mxu0 0
    %1016 = vmatpush2.bf16.msra.mxu0 0
    %1017 = vmatprep.subr.bf16.mxu0 0
    %1018 = vmatpush2.bf16.msra.mxu0 0
    %1019 = vmatprep.subr.bf16.mxu0 0
    %1020 = vmatpush2.bf16.msra.mxu0 0
    %1021 = vmatprep.subr.bf16.mxu0 0
    %1022 = vmatpush2.bf16.msra.mxu0 0
    %1023 = vmatprep.subr.bf16.mxu0 0
    %1024 = vmatpush2.bf16.msra.mxu0 0
    %1025 = vmatprep.subr.bf16.mxu0 0
    %1026 = vmatpush2.bf16.msra.mxu0 0
    %1027 = vmatprep.mubr.bf16.mxu0 0
    %1028 = vmatmul.mubr.bf16.gmra.mxu0 %v993
    %v1029 = vpop.f32.mrf.mxu0
    %v1030 = vadd.f32 %v217, %v1029
    %v1031 = vpop.f32.mrf.mxu0
    %v1032 = vadd.f32 %v221, %v1031
    %v1033 = vpop.f32.mrf.mxu0
    %v1034 = vpop.f32.mrf.mxu0
    %1035 = vdwg.mxu0
    %v1036 = vxor.u32 %v1030, 2147483648
    %v1037 = vxor.u32 %v1032, 2147483648
    %v1038 = vmul.f32 %v1036, 1.442695
    %v1039 = vpow.pop %v1038
    %v1040 = vmul.f32 %v1037, 1.442695
    %v1041 = vpow.pop %v1040
    %v1042 = vadd.f32 %v1039, 1.0
    %v1043 = vadd.f32 %v1041, 1.0
    %v1044 = vrcp.pop %v1042
    %v1045 = vmul.f32 1.0, %v1044
    %v1046 = vrcp.pop %v1043
    %v1047 = vmul.f32 1.0, %v1046
    %v1048 = vmul.f32 %v1047, 2.0
    %v1049 = vsub.f32 %v1048, 1.0
    %v1050 = vmul.f32 %v1045, %v838
    %v1051 = vmul.f32 %v1045, %v1049
    %1053 = vrot.lane.b32.xlu0 %v1051, 64
    %v1054 = vpop.permute.xlu0 %1053
    %v1056 = vadd.f32 %v1050, %v1054
    %v1057 = vtanh.pop %v1056
    %v1058 = vmul.f32 %v1047, %v1057
    %v1059 = vlaneseq
    %v1060 = vshrl.u32 %v1059, 7
    %v1061 = vsub.s32 3, %v1060
    %v1062 = vrot.slane %v139, %v1061
    %1064 = vrot.lane.b32.xlu0 %v1062, 64
    %v1065 = vpop.permute.xlu0 %1064
    %v1067 = vmul.f32 %v1058, %v1065
    %v1068 = vadd.f32 %v850, %v1067
    %v1069 = vpack.c.bf16 %v971, %v971
    %v1070 = vpack.c.bf16 %v972, %v972
    %v1073 = vunpack.c.l.b16 %v1069
    %v1074 = vunpack.c.l.b16 %v1070
    %v1075 = vrot.slane %v1073, 3
    %v1076 = vrot.slane %v1074, 2
    %v1077 = vsel %vm189, %v1076, %v1075
    %v1078 = vpack.c.b16 %v1077, %v1077
    %1079 = vrot.lane.b32.xlu0 %v1078, 64
    %v1080 = vpop.permute.xlu0 %1079
    %v1082 = vsel %vm194, %v1080, 0
    %1084 = vmatprep.subr.bf16.mxu0 0
    %1085 = vmatpush1.bf16.msra.mxu0 0
    %1086 = vmatprep.subr.bf16.mxu0 0
    %1087 = vmatpush1.bf16.msra.mxu0 0
    %1088 = vmatprep.subr.bf16.mxu0 0
    %1089 = vmatpush1.bf16.msra.mxu0 0
    %1090 = vmatprep.subr.bf16.mxu0 0
    %1091 = vmatpush1.bf16.msra.mxu0 0
    %1092 = vmatprep.subr.bf16.mxu0 %v428
    %1093 = vmatpush1.bf16.msra.mxu0 %v427
    %1094 = vmatprep.subr.bf16.mxu0 %v426
    %1095 = vmatpush1.bf16.msra.mxu0 %v425
    %1096 = vmatprep.subr.bf16.mxu0 %v424
    %1097 = vmatpush1.bf16.msra.mxu0 %v423
    %1098 = vmatprep.subr.bf16.mxu0 %v422
    %1099 = vmatpush1.bf16.msra.mxu0 %v421
    %1100 = vmatprep.subr.bf16.mxu0 0
    %1101 = vmatpush2.bf16.msra.mxu0 0
    %1102 = vmatprep.subr.bf16.mxu0 0
    %1103 = vmatpush2.bf16.msra.mxu0 0
    %1104 = vmatprep.subr.bf16.mxu0 0
    %1105 = vmatpush2.bf16.msra.mxu0 0
    %1106 = vmatprep.subr.bf16.mxu0 0
    %1107 = vmatpush2.bf16.msra.mxu0 0
    %1108 = vmatprep.subr.bf16.mxu0 0
    %1109 = vmatpush2.bf16.msra.mxu0 0
    %1110 = vmatprep.subr.bf16.mxu0 0
    %1111 = vmatpush2.bf16.msra.mxu0 0
    %1112 = vmatprep.subr.bf16.mxu0 0
    %1113 = vmatpush2.bf16.msra.mxu0 0
    %1114 = vmatprep.subr.bf16.mxu0 0
    %1115 = vmatpush2.bf16.msra.mxu0 0
    %1116 = vmatprep.mubr.bf16.mxu0 0
    %1117 = vmatmul.mubr.bf16.gmra.mxu0 %v1082
    %v1118 = vpop.f32.mrf.mxu0
    %v1119 = vadd.f32 0.0, %v1118
    %v1120 = vpop.f32.mrf.mxu0
    %v1121 = vadd.f32 0.0, %v1120
    %v1122 = vpop.f32.mrf.mxu0
    %v1123 = vpop.f32.mrf.mxu0
    %1124 = vdwg.mxu0
    %v1127 = vrot.slane %v1119, 4
    %v1128 = vrot.slane %v1121, 4
    %v1129 = vrot.slane %v1119, 5
    %v1130 = vrot.slane %v1121, 5
    %v1135 = vadd.f32 %v130, %v1127
    %v1136 = vadd.f32 %v132, %v1128
    %v1137 = vadd.f32 %v134, %v1129
    %v1138 = vadd.f32 %v136, %v1130
    %v1139 = vxor.u32 %v1135, 2147483648
    %v1140 = vxor.u32 %v1136, 2147483648
    %v1141 = vxor.u32 %v1137, 2147483648
    %v1142 = vxor.u32 %v1138, 2147483648
    %v1143 = vmul.f32 %v1139, 1.442695
    %v1144 = vpow.pop %v1143
    %v1145 = vmul.f32 %v1140, 1.442695
    %v1146 = vpow.pop %v1145
    %v1147 = vmul.f32 %v1141, 1.442695
    %v1148 = vpow.pop %v1147
    %v1149 = vmul.f32 %v1142, 1.442695
    %v1150 = vpow.pop %v1149
    %v1151 = vadd.f32 %v1144, 1.0
    %v1152 = vadd.f32 %v1146, 1.0
    %v1153 = vadd.f32 %v1148, 1.0
    %v1154 = vadd.f32 %v1150, 1.0
    %v1155 = vrcp.pop %v1151
    %v1156 = vmul.f32 1.0, %v1155
    %v1157 = vrcp.pop %v1152
    %v1158 = vmul.f32 1.0, %v1157
    %v1159 = vrcp.pop %v1153
    %v1160 = vmul.f32 1.0, %v1159
    %v1161 = vrcp.pop %v1154
    %v1162 = vmul.f32 1.0, %v1161
    %v1163 = vmul.f32 %v1158, 2.0
    %v1164 = vmul.f32 %v1162, 2.0
    %v1165 = vsub.f32 %v1163, 1.0
    %v1166 = vsub.f32 %v1164, 1.0
    %v1169 = vrot.slane %v967, 7
    %v1170 = vrot.slane %v968, 7
    %v1173 = vmul.f32 %v1156, %v1169
    %v1174 = vmul.f32 %v1160, %v1170
    %v1175 = vmul.f32 %v1156, %v1165
    %v1176 = vmul.f32 %v1160, %v1166
    %1179 = vrot.lane.b32.xlu0 %v1175, 64
    %v1180 = vpop.permute.xlu0 %1179
    %1181 = vrot.lane.b32.xlu0 %v1176, 64
    %v1182 = vpop.permute.xlu0 %1181
    %v1185 = vadd.f32 %v1173, %v1180
    %v1186 = vadd.f32 %v1174, %v1182
    %v1187 = vtanh.pop %v1185
    %v1188 = vtanh.pop %v1186
    %v1189 = vmul.f32 %v1158, %v1187
    %v1190 = vmul.f32 %v1162, %v1188
    %v1193 = vrot.slane %v1190, 7
    %vm1194 = vcmask 1045509
    %v1195 = vsel %vm1194, %v1193, %v1189
    %1196 = vrot.lane.b32.xlu0 %v1195, 64
    %v1197 = vpop.permute.xlu0 %1196
    %v1200 = vrot.slane %v1058, 4
    %v1202 = vsel %vm194, %v1197, %v1200
    %v1203 = vpack.c.bf16 %v1202, %v1202
    %v1205 = vrot.slane %v1203, 2
    %1207 = vmatprep.subr.bf16.mxu0 %v287
    %1208 = vmatpush1.bf16.msra.mxu0 %v286
    %1209 = vmatprep.subr.bf16.mxu0 %v285
    %1210 = vmatpush1.bf16.msra.mxu0 %v284
    %1211 = vmatprep.subr.bf16.mxu0 %v283
    %1212 = vmatpush1.bf16.msra.mxu0 %v282
    %1213 = vmatprep.subr.bf16.mxu0 %v281
    %1214 = vmatpush1.bf16.msra.mxu0 %v280
    %1215 = vmatprep.subr.bf16.mxu0 %v279
    %1216 = vmatpush1.bf16.msra.mxu0 %v278
    %1217 = vmatprep.subr.bf16.mxu0 %v277
    %1218 = vmatpush1.bf16.msra.mxu0 %v276
    %1219 = vmatprep.subr.bf16.mxu0 %v275
    %1220 = vmatpush1.bf16.msra.mxu0 %v274
    %1221 = vmatprep.subr.bf16.mxu0 %v273
    %1222 = vmatpush1.bf16.msra.mxu0 %v272
    %1223 = vmatprep.subr.bf16.mxu0 0
    %1224 = vmatpush2.bf16.msra.mxu0 0
    %1225 = vmatprep.subr.bf16.mxu0 0
    %1226 = vmatpush2.bf16.msra.mxu0 0
    %1227 = vmatprep.subr.bf16.mxu0 0
    %1228 = vmatpush2.bf16.msra.mxu0 0
    %1229 = vmatprep.subr.bf16.mxu0 0
    %1230 = vmatpush2.bf16.msra.mxu0 0
    %1231 = vmatprep.subr.bf16.mxu0 0
    %1232 = vmatpush2.bf16.msra.mxu0 0
    %1233 = vmatprep.subr.bf16.mxu0 0
    %1234 = vmatpush2.bf16.msra.mxu0 0
    %1235 = vmatprep.subr.bf16.mxu0 0
    %1236 = vmatpush2.bf16.msra.mxu0 0
    %1237 = vmatprep.subr.bf16.mxu0 0
    %1238 = vmatpush2.bf16.msra.mxu0 0
    %1239 = vmatprep.mubr.bf16.mxu0 0
    %1240 = vmatmul.mubr.bf16.gmra.mxu0 %v1205
    %v1241 = vpop.f32.mrf.mxu0
    %v1242 = vadd.f32 %v217, %v1241
    %v1243 = vpop.f32.mrf.mxu0
    %v1244 = vadd.f32 %v221, %v1243
    %v1245 = vpop.f32.mrf.mxu0
    %v1246 = vpop.f32.mrf.mxu0
    %1247 = vdwg.mxu0
    %v1248 = vxor.u32 %v1242, 2147483648
    %v1249 = vxor.u32 %v1244, 2147483648
    %v1250 = vmul.f32 %v1248, 1.442695
    %v1251 = vpow.pop %v1250
    %v1252 = vmul.f32 %v1249, 1.442695
    %v1253 = vpow.pop %v1252
    %v1254 = vadd.f32 %v1251, 1.0
    %v1255 = vadd.f32 %v1253, 1.0
    %v1256 = vrcp.pop %v1254
    %v1257 = vmul.f32 1.0, %v1256
    %v1258 = vrcp.pop %v1255
    %v1259 = vmul.f32 1.0, %v1258
    %v1260 = vmul.f32 %v1259, 2.0
    %v1261 = vsub.f32 %v1260, 1.0
    %v1262 = vmul.f32 %v1257, %v1056
    %v1263 = vmul.f32 %v1257, %v1261
    %1265 = vrot.lane.b32.xlu0 %v1263, 64
    %v1266 = vpop.permute.xlu0 %1265
    %v1268 = vadd.f32 %v1262, %v1266
    %v1269 = vtanh.pop %v1268
    %v1270 = vmul.f32 %v1259, %v1269
    %v1271 = vlaneseq
    %v1272 = vshrl.u32 %v1271, 7
    %v1273 = vsub.s32 4, %v1272
    %v1274 = vrot.slane %v139, %v1273
    %1276 = vrot.lane.b32.xlu0 %v1274, 64
    %v1277 = vpop.permute.xlu0 %1276
    %v1279 = vmul.f32 %v1270, %v1277
    %v1280 = vadd.f32 %v1068, %v1279
    %v1281 = vpack.c.bf16 %v1189, %v1189
    %v1282 = vpack.c.bf16 %v1190, %v1190
    %v1285 = vunpack.c.l.b16 %v1281
    %v1286 = vunpack.c.l.b16 %v1282
    %v1287 = vrot.slane %v1285, 4
    %v1288 = vrot.slane %v1286, 3
    %v1289 = vsel %vm189, %v1288, %v1287
    %v1290 = vpack.c.b16 %v1289, %v1289
    %1291 = vrot.lane.b32.xlu0 %v1290, 64
    %v1292 = vpop.permute.xlu0 %1291
    %v1294 = vsel %vm194, %v1292, 0
    %1296 = vmatprep.subr.bf16.mxu0 0
    %1297 = vmatpush1.bf16.msra.mxu0 0
    %1298 = vmatprep.subr.bf16.mxu0 0
    %1299 = vmatpush1.bf16.msra.mxu0 0
    %1300 = vmatprep.subr.bf16.mxu0 0
    %1301 = vmatpush1.bf16.msra.mxu0 0
    %1302 = vmatprep.subr.bf16.mxu0 0
    %1303 = vmatpush1.bf16.msra.mxu0 0
    %1304 = vmatprep.subr.bf16.mxu0 %v428
    %1305 = vmatpush1.bf16.msra.mxu0 %v427
    %1306 = vmatprep.subr.bf16.mxu0 %v426
    %1307 = vmatpush1.bf16.msra.mxu0 %v425
    %1308 = vmatprep.subr.bf16.mxu0 %v424
    %1309 = vmatpush1.bf16.msra.mxu0 %v423
    %1310 = vmatprep.subr.bf16.mxu0 %v422
    %1311 = vmatpush1.bf16.msra.mxu0 %v421
    %1312 = vmatprep.subr.bf16.mxu0 0
    %1313 = vmatpush2.bf16.msra.mxu0 0
    %1314 = vmatprep.subr.bf16.mxu0 0
    %1315 = vmatpush2.bf16.msra.mxu0 0
    %1316 = vmatprep.subr.bf16.mxu0 0
    %1317 = vmatpush2.bf16.msra.mxu0 0
    %1318 = vmatprep.subr.bf16.mxu0 0
    %1319 = vmatpush2.bf16.msra.mxu0 0
    %1320 = vmatprep.subr.bf16.mxu0 0
    %1321 = vmatpush2.bf16.msra.mxu0 0
    %1322 = vmatprep.subr.bf16.mxu0 0
    %1323 = vmatpush2.bf16.msra.mxu0 0
    %1324 = vmatprep.subr.bf16.mxu0 0
    %1325 = vmatpush2.bf16.msra.mxu0 0
    %1326 = vmatprep.subr.bf16.mxu0 0
    %1327 = vmatpush2.bf16.msra.mxu0 0
    %1328 = vmatprep.mubr.bf16.mxu0 0
    %1329 = vmatmul.mubr.bf16.gmra.mxu0 %v1294
    %v1330 = vpop.f32.mrf.mxu0
    %v1331 = vadd.f32 0.0, %v1330
    %v1332 = vpop.f32.mrf.mxu0
    %v1333 = vadd.f32 0.0, %v1332
    %v1334 = vpop.f32.mrf.mxu0
    %v1335 = vpop.f32.mrf.mxu0
    %1336 = vdwg.mxu0
    %v1339 = vrot.slane %v1331, 3
    %v1340 = vrot.slane %v1333, 3
    %v1341 = vrot.slane %v1331, 4
    %v1342 = vrot.slane %v1333, 4
    %v1347 = vadd.f32 %v130, %v1339
    %v1348 = vadd.f32 %v132, %v1340
    %v1349 = vadd.f32 %v134, %v1341
    %v1350 = vadd.f32 %v136, %v1342
    %v1351 = vxor.u32 %v1347, 2147483648
    %v1352 = vxor.u32 %v1348, 2147483648
    %v1353 = vxor.u32 %v1349, 2147483648
    %v1354 = vxor.u32 %v1350, 2147483648
    %v1355 = vmul.f32 %v1351, 1.442695
    %v1356 = vpow.pop %v1355
    %v1357 = vmul.f32 %v1352, 1.442695
    %v1358 = vpow.pop %v1357
    %v1359 = vmul.f32 %v1353, 1.442695
    %v1360 = vpow.pop %v1359
    %v1361 = vmul.f32 %v1354, 1.442695
    %v1362 = vpow.pop %v1361
    %v1363 = vadd.f32 %v1356, 1.0
    %v1364 = vadd.f32 %v1358, 1.0
    %v1365 = vadd.f32 %v1360, 1.0
    %v1366 = vadd.f32 %v1362, 1.0
    %v1367 = vrcp.pop %v1363
    %v1368 = vmul.f32 1.0, %v1367
    %v1369 = vrcp.pop %v1364
    %v1370 = vmul.f32 1.0, %v1369
    %v1371 = vrcp.pop %v1365
    %v1372 = vmul.f32 1.0, %v1371
    %v1373 = vrcp.pop %v1366
    %v1374 = vmul.f32 1.0, %v1373
    %v1375 = vmul.f32 %v1370, 2.0
    %v1376 = vmul.f32 %v1374, 2.0
    %v1377 = vsub.f32 %v1375, 1.0
    %v1378 = vsub.f32 %v1376, 1.0
    %v1381 = vrot.slane %v1185, 7
    %v1382 = vrot.slane %v1186, 7
    %v1385 = vmul.f32 %v1368, %v1381
    %v1386 = vmul.f32 %v1372, %v1382
    %v1387 = vmul.f32 %v1368, %v1377
    %v1388 = vmul.f32 %v1372, %v1378
    %1391 = vrot.lane.b32.xlu0 %v1387, 64
    %v1392 = vpop.permute.xlu0 %1391
    %1393 = vrot.lane.b32.xlu0 %v1388, 64
    %v1394 = vpop.permute.xlu0 %1393
    %v1397 = vadd.f32 %v1385, %v1392
    %v1398 = vadd.f32 %v1386, %v1394
    %v1399 = vtanh.pop %v1397
    %v1400 = vtanh.pop %v1398
    %v1401 = vmul.f32 %v1370, %v1399
    %v1402 = vmul.f32 %v1374, %v1400
    %v1405 = vrot.slane %v1402, 7
    %vm1406 = vcmask 1046534
    %v1407 = vsel %vm1406, %v1405, %v1401
    %1408 = vrot.lane.b32.xlu0 %v1407, 64
    %v1409 = vpop.permute.xlu0 %1408
    %v1412 = vrot.slane %v1270, 3
    %v1414 = vsel %vm194, %v1409, %v1412
    %v1415 = vpack.c.bf16 %v1414, %v1414
    %v1417 = vshrl.u32 %v1415, 16
    %v1419 = vrot.slane %v1417, 2
    %v1420 = vshll.u32 %v1415, 16
    %v1422 = vrot.slane %v1420, 3
    %v1423 = vor.u32 %v1419, %v1422
    %1425 = vmatprep.subr.bf16.mxu0 %v287
    %1426 = vmatpush1.bf16.msra.mxu0 %v286
    %1427 = vmatprep.subr.bf16.mxu0 %v285
    %1428 = vmatpush1.bf16.msra.mxu0 %v284
    %1429 = vmatprep.subr.bf16.mxu0 %v283
    %1430 = vmatpush1.bf16.msra.mxu0 %v282
    %1431 = vmatprep.subr.bf16.mxu0 %v281
    %1432 = vmatpush1.bf16.msra.mxu0 %v280
    %1433 = vmatprep.subr.bf16.mxu0 %v279
    %1434 = vmatpush1.bf16.msra.mxu0 %v278
    %1435 = vmatprep.subr.bf16.mxu0 %v277
    %1436 = vmatpush1.bf16.msra.mxu0 %v276
    %1437 = vmatprep.subr.bf16.mxu0 %v275
    %1438 = vmatpush1.bf16.msra.mxu0 %v274
    %1439 = vmatprep.subr.bf16.mxu0 %v273
    %1440 = vmatpush1.bf16.msra.mxu0 %v272
    %1441 = vmatprep.subr.bf16.mxu0 0
    %1442 = vmatpush2.bf16.msra.mxu0 0
    %1443 = vmatprep.subr.bf16.mxu0 0
    %1444 = vmatpush2.bf16.msra.mxu0 0
    %1445 = vmatprep.subr.bf16.mxu0 0
    %1446 = vmatpush2.bf16.msra.mxu0 0
    %1447 = vmatprep.subr.bf16.mxu0 0
    %1448 = vmatpush2.bf16.msra.mxu0 0
    %1449 = vmatprep.subr.bf16.mxu0 0
    %1450 = vmatpush2.bf16.msra.mxu0 0
    %1451 = vmatprep.subr.bf16.mxu0 0
    %1452 = vmatpush2.bf16.msra.mxu0 0
    %1453 = vmatprep.subr.bf16.mxu0 0
    %1454 = vmatpush2.bf16.msra.mxu0 0
    %1455 = vmatprep.subr.bf16.mxu0 0
    %1456 = vmatpush2.bf16.msra.mxu0 0
    %1457 = vmatprep.mubr.bf16.mxu0 0
    %1458 = vmatmul.mubr.bf16.gmra.mxu0 %v1423
    %v1459 = vpop.f32.mrf.mxu0
    %v1460 = vadd.f32 %v217, %v1459
    %v1461 = vpop.f32.mrf.mxu0
    %v1462 = vadd.f32 %v221, %v1461
    %v1463 = vpop.f32.mrf.mxu0
    %v1464 = vpop.f32.mrf.mxu0
    %1465 = vdwg.mxu0
    %v1466 = vxor.u32 %v1460, 2147483648
    %v1467 = vxor.u32 %v1462, 2147483648
    %v1468 = vmul.f32 %v1466, 1.442695
    %v1469 = vpow.pop %v1468
    %v1470 = vmul.f32 %v1467, 1.442695
    %v1471 = vpow.pop %v1470
    %v1472 = vadd.f32 %v1469, 1.0
    %v1473 = vadd.f32 %v1471, 1.0
    %v1474 = vrcp.pop %v1472
    %v1475 = vmul.f32 1.0, %v1474
    %v1476 = vrcp.pop %v1473
    %v1477 = vmul.f32 1.0, %v1476
    %v1478 = vmul.f32 %v1477, 2.0
    %v1479 = vsub.f32 %v1478, 1.0
    %v1480 = vmul.f32 %v1475, %v1268
    %v1481 = vmul.f32 %v1475, %v1479
    %1483 = vrot.lane.b32.xlu0 %v1481, 64
    %v1484 = vpop.permute.xlu0 %1483
    %v1486 = vadd.f32 %v1480, %v1484
    %v1487 = vtanh.pop %v1486
    %v1488 = vmul.f32 %v1477, %v1487
    %v1489 = vlaneseq
    %v1490 = vshrl.u32 %v1489, 7
    %v1491 = vsub.s32 5, %v1490
    %v1492 = vrot.slane %v139, %v1491
    %1494 = vrot.lane.b32.xlu0 %v1492, 64
    %v1495 = vpop.permute.xlu0 %1494
    %v1497 = vmul.f32 %v1488, %v1495
    %v1498 = vadd.f32 %v1280, %v1497
    %v1499 = vpack.c.bf16 %v1401, %v1401
    %v1500 = vpack.c.bf16 %v1402, %v1402
    %v1503 = vunpack.c.l.b16 %v1499
    %v1504 = vunpack.c.l.b16 %v1500
    %v1505 = vrot.slane %v1503, 5
    %v1506 = vrot.slane %v1504, 4
    %v1507 = vsel %vm189, %v1506, %v1505
    %v1508 = vpack.c.b16 %v1507, %v1507
    %1509 = vrot.lane.b32.xlu0 %v1508, 64
    %v1510 = vpop.permute.xlu0 %1509
    %v1512 = vsel %vm194, %v1510, 0
    %1514 = vmatprep.subr.bf16.mxu0 0
    %1515 = vmatpush1.bf16.msra.mxu0 0
    %1516 = vmatprep.subr.bf16.mxu0 0
    %1517 = vmatpush1.bf16.msra.mxu0 0
    %1518 = vmatprep.subr.bf16.mxu0 0
    %1519 = vmatpush1.bf16.msra.mxu0 0
    %1520 = vmatprep.subr.bf16.mxu0 0
    %1521 = vmatpush1.bf16.msra.mxu0 0
    %1522 = vmatprep.subr.bf16.mxu0 %v428
    %1523 = vmatpush1.bf16.msra.mxu0 %v427
    %1524 = vmatprep.subr.bf16.mxu0 %v426
    %1525 = vmatpush1.bf16.msra.mxu0 %v425
    %1526 = vmatprep.subr.bf16.mxu0 %v424
    %1527 = vmatpush1.bf16.msra.mxu0 %v423
    %1528 = vmatprep.subr.bf16.mxu0 %v422
    %1529 = vmatpush1.bf16.msra.mxu0 %v421
    %1530 = vmatprep.subr.bf16.mxu0 0
    %1531 = vmatpush2.bf16.msra.mxu0 0
    %1532 = vmatprep.subr.bf16.mxu0 0
    %1533 = vmatpush2.bf16.msra.mxu0 0
    %1534 = vmatprep.subr.bf16.mxu0 0
    %1535 = vmatpush2.bf16.msra.mxu0 0
    %1536 = vmatprep.subr.bf16.mxu0 0
    %1537 = vmatpush2.bf16.msra.mxu0 0
    %1538 = vmatprep.subr.bf16.mxu0 0
    %1539 = vmatpush2.bf16.msra.mxu0 0
    %1540 = vmatprep.subr.bf16.mxu0 0
    %1541 = vmatpush2.bf16.msra.mxu0 0
    %1542 = vmatprep.subr.bf16.mxu0 0
    %1543 = vmatpush2.bf16.msra.mxu0 0
    %1544 = vmatprep.subr.bf16.mxu0 0
    %1545 = vmatpush2.bf16.msra.mxu0 0
    %1546 = vmatprep.mubr.bf16.mxu0 0
    %1547 = vmatmul.mubr.bf16.gmra.mxu0 %v1512
    %v1548 = vpop.f32.mrf.mxu0
    %v1549 = vadd.f32 0.0, %v1548
    %v1550 = vpop.f32.mrf.mxu0
    %v1551 = vadd.f32 0.0, %v1550
    %v1552 = vpop.f32.mrf.mxu0
    %v1553 = vpop.f32.mrf.mxu0
    %1554 = vdwg.mxu0
    %v1557 = vrot.slane %v1549, 2
    %v1558 = vrot.slane %v1551, 2
    %v1559 = vrot.slane %v1549, 3
    %v1560 = vrot.slane %v1551, 3
    %v1565 = vadd.f32 %v130, %v1557
    %v1566 = vadd.f32 %v132, %v1558
    %v1567 = vadd.f32 %v134, %v1559
    %v1568 = vadd.f32 %v136, %v1560
    %v1569 = vxor.u32 %v1565, 2147483648
    %v1570 = vxor.u32 %v1566, 2147483648
    %v1571 = vxor.u32 %v1567, 2147483648
    %v1572 = vxor.u32 %v1568, 2147483648
    %v1573 = vmul.f32 %v1569, 1.442695
    %v1574 = vpow.pop %v1573
    %v1575 = vmul.f32 %v1570, 1.442695
    %v1576 = vpow.pop %v1575
    %v1577 = vmul.f32 %v1571, 1.442695
    %v1578 = vpow.pop %v1577
    %v1579 = vmul.f32 %v1572, 1.442695
    %v1580 = vpow.pop %v1579
    %v1581 = vadd.f32 %v1574, 1.0
    %v1582 = vadd.f32 %v1576, 1.0
    %v1583 = vadd.f32 %v1578, 1.0
    %v1584 = vadd.f32 %v1580, 1.0
    %v1585 = vrcp.pop %v1581
    %v1586 = vmul.f32 1.0, %v1585
    %v1587 = vrcp.pop %v1582
    %v1588 = vmul.f32 1.0, %v1587
    %v1589 = vrcp.pop %v1583
    %v1590 = vmul.f32 1.0, %v1589
    %v1591 = vrcp.pop %v1584
    %v1592 = vmul.f32 1.0, %v1591
    %v1593 = vmul.f32 %v1588, 2.0
    %v1594 = vmul.f32 %v1592, 2.0
    %v1595 = vsub.f32 %v1593, 1.0
    %v1596 = vsub.f32 %v1594, 1.0
    %v1599 = vrot.slane %v1397, 7
    %v1600 = vrot.slane %v1398, 7
    %v1603 = vmul.f32 %v1586, %v1599
    %v1604 = vmul.f32 %v1590, %v1600
    %v1605 = vmul.f32 %v1586, %v1595
    %v1606 = vmul.f32 %v1590, %v1596
    %1609 = vrot.lane.b32.xlu0 %v1605, 64
    %v1610 = vpop.permute.xlu0 %1609
    %1611 = vrot.lane.b32.xlu0 %v1606, 64
    %v1612 = vpop.permute.xlu0 %1611
    %v1615 = vadd.f32 %v1603, %v1610
    %v1616 = vadd.f32 %v1604, %v1612
    %v1617 = vtanh.pop %v1615
    %v1618 = vtanh.pop %v1616
    %v1619 = vmul.f32 %v1588, %v1617
    %v1620 = vmul.f32 %v1592, %v1618
    %v1623 = vrot.slane %v1620, 7
    %vm1624 = vcmask 1047559
    %v1625 = vsel %vm1624, %v1623, %v1619
    %1626 = vrot.lane.b32.xlu0 %v1625, 64
    %v1627 = vpop.permute.xlu0 %1626
    %v1630 = vrot.slane %v1488, 2
    %v1632 = vsel %vm194, %v1627, %v1630
    %v1633 = vpack.c.bf16 %v1632, %v1632
    %v1635 = vrot.slane %v1633, 3
    %1637 = vmatprep.subr.bf16.mxu0 %v287
    %1638 = vmatpush1.bf16.msra.mxu0 %v286
    %1639 = vmatprep.subr.bf16.mxu0 %v285
    %1640 = vmatpush1.bf16.msra.mxu0 %v284
    %1641 = vmatprep.subr.bf16.mxu0 %v283
    %1642 = vmatpush1.bf16.msra.mxu0 %v282
    %1643 = vmatprep.subr.bf16.mxu0 %v281
    %1644 = vmatpush1.bf16.msra.mxu0 %v280
    %1645 = vmatprep.subr.bf16.mxu0 %v279
    %1646 = vmatpush1.bf16.msra.mxu0 %v278
    %1647 = vmatprep.subr.bf16.mxu0 %v277
    %1648 = vmatpush1.bf16.msra.mxu0 %v276
    %1649 = vmatprep.subr.bf16.mxu0 %v275
    %1650 = vmatpush1.bf16.msra.mxu0 %v274
    %1651 = vmatprep.subr.bf16.mxu0 %v273
    %1652 = vmatpush1.bf16.msra.mxu0 %v272
    %1653 = vmatprep.subr.bf16.mxu0 0
    %1654 = vmatpush2.bf16.msra.mxu0 0
    %1655 = vmatprep.subr.bf16.mxu0 0
    %1656 = vmatpush2.bf16.msra.mxu0 0
    %1657 = vmatprep.subr.bf16.mxu0 0
    %1658 = vmatpush2.bf16.msra.mxu0 0
    %1659 = vmatprep.subr.bf16.mxu0 0
    %1660 = vmatpush2.bf16.msra.mxu0 0
    %1661 = vmatprep.subr.bf16.mxu0 0
    %1662 = vmatpush2.bf16.msra.mxu0 0
    %1663 = vmatprep.subr.bf16.mxu0 0
    %1664 = vmatpush2.bf16.msra.mxu0 0
    %1665 = vmatprep.subr.bf16.mxu0 0
    %1666 = vmatpush2.bf16.msra.mxu0 0
    %1667 = vmatprep.subr.bf16.mxu0 0
    %1668 = vmatpush2.bf16.msra.mxu0 0
    %1669 = vmatprep.mubr.bf16.mxu0 0
    %1670 = vmatmul.mubr.bf16.gmra.mxu0 %v1635
    %v1671 = vpop.f32.mrf.mxu0
    %v1672 = vadd.f32 %v217, %v1671
    %v1673 = vpop.f32.mrf.mxu0
    %v1674 = vadd.f32 %v221, %v1673
    %v1675 = vpop.f32.mrf.mxu0
    %v1676 = vpop.f32.mrf.mxu0
    %1677 = vdwg.mxu0
    %v1678 = vxor.u32 %v1672, 2147483648
    %v1679 = vxor.u32 %v1674, 2147483648
    %v1680 = vmul.f32 %v1678, 1.442695
    %v1681 = vpow.pop %v1680
    %v1682 = vmul.f32 %v1679, 1.442695
    %v1683 = vpow.pop %v1682
    %v1684 = vadd.f32 %v1681, 1.0
    %v1685 = vadd.f32 %v1683, 1.0
    %v1686 = vrcp.pop %v1684
    %v1687 = vmul.f32 1.0, %v1686
    %v1688 = vrcp.pop %v1685
    %v1689 = vmul.f32 1.0, %v1688
    %v1690 = vmul.f32 %v1689, 2.0
    %v1691 = vsub.f32 %v1690, 1.0
    %v1692 = vmul.f32 %v1687, %v1486
    %v1693 = vmul.f32 %v1687, %v1691
    %1695 = vrot.lane.b32.xlu0 %v1693, 64
    %v1696 = vpop.permute.xlu0 %1695
    %v1698 = vadd.f32 %v1692, %v1696
    %v1699 = vtanh.pop %v1698
    %v1700 = vmul.f32 %v1689, %v1699
    %v1701 = vlaneseq
    %v1702 = vshrl.u32 %v1701, 7
    %v1703 = vsub.s32 6, %v1702
    %v1704 = vrot.slane %v139, %v1703
    %1706 = vrot.lane.b32.xlu0 %v1704, 64
    %v1707 = vpop.permute.xlu0 %1706
    %v1709 = vmul.f32 %v1700, %v1707
    %v1710 = vadd.f32 %v1498, %v1709
    %v1711 = vpack.c.bf16 %v1619, %v1619
    %v1712 = vpack.c.bf16 %v1620, %v1620
    %v1715 = vunpack.c.l.b16 %v1711
    %v1716 = vunpack.c.l.b16 %v1712
    %v1717 = vrot.slane %v1715, 6
    %v1718 = vrot.slane %v1716, 5
    %v1719 = vsel %vm189, %v1718, %v1717
    %v1720 = vpack.c.b16 %v1719, %v1719
    %1721 = vrot.lane.b32.xlu0 %v1720, 64
    %v1722 = vpop.permute.xlu0 %1721
    %v1724 = vsel %vm194, %v1722, 0
    %1726 = vmatprep.subr.bf16.mxu0 0
    %1727 = vmatpush1.bf16.msra.mxu0 0
    %1728 = vmatprep.subr.bf16.mxu0 0
    %1729 = vmatpush1.bf16.msra.mxu0 0
    %1730 = vmatprep.subr.bf16.mxu0 0
    %1731 = vmatpush1.bf16.msra.mxu0 0
    %1732 = vmatprep.subr.bf16.mxu0 0
    %1733 = vmatpush1.bf16.msra.mxu0 0
    %1734 = vmatprep.subr.bf16.mxu0 %v428
    %1735 = vmatpush1.bf16.msra.mxu0 %v427
    %1736 = vmatprep.subr.bf16.mxu0 %v426
    %1737 = vmatpush1.bf16.msra.mxu0 %v425
    %1738 = vmatprep.subr.bf16.mxu0 %v424
    %1739 = vmatpush1.bf16.msra.mxu0 %v423
    %1740 = vmatprep.subr.bf16.mxu0 %v422
    %1741 = vmatpush1.bf16.msra.mxu0 %v421
    %1742 = vmatprep.subr.bf16.mxu0 0
    %1743 = vmatpush2.bf16.msra.mxu0 0
    %1744 = vmatprep.subr.bf16.mxu0 0
    %1745 = vmatpush2.bf16.msra.mxu0 0
    %1746 = vmatprep.subr.bf16.mxu0 0
    %1747 = vmatpush2.bf16.msra.mxu0 0
    %1748 = vmatprep.subr.bf16.mxu0 0
    %1749 = vmatpush2.bf16.msra.mxu0 0
    %1750 = vmatprep.subr.bf16.mxu0 0
    %1751 = vmatpush2.bf16.msra.mxu0 0
    %1752 = vmatprep.subr.bf16.mxu0 0
    %1753 = vmatpush2.bf16.msra.mxu0 0
    %1754 = vmatprep.subr.bf16.mxu0 0
    %1755 = vmatpush2.bf16.msra.mxu0 0
    %1756 = vmatprep.subr.bf16.mxu0 0
    %1757 = vmatpush2.bf16.msra.mxu0 0
    %1758 = vmatprep.mubr.bf16.mxu0 0
    %1759 = vmatmul.mubr.bf16.gmra.mxu0 %v1724
    %v1760 = vpop.f32.mrf.mxu0
    %v1761 = vadd.f32 0.0, %v1760
    %v1762 = vpop.f32.mrf.mxu0
    %v1763 = vadd.f32 0.0, %v1762
    %v1764 = vpop.f32.mrf.mxu0
    %v1765 = vpop.f32.mrf.mxu0
    %1766 = vdwg.mxu0
    %v1769 = vrot.slane %v1761, 1
    %v1770 = vrot.slane %v1763, 1
    %v1771 = vrot.slane %v1761, 2
    %v1772 = vrot.slane %v1763, 2
    %v1777 = vadd.f32 %v130, %v1769
    %v1778 = vadd.f32 %v132, %v1770
    %v1779 = vadd.f32 %v134, %v1771
    %v1780 = vadd.f32 %v136, %v1772
    %v1781 = vxor.u32 %v1777, 2147483648
    %v1782 = vxor.u32 %v1778, 2147483648
    %v1783 = vxor.u32 %v1779, 2147483648
    %v1784 = vxor.u32 %v1780, 2147483648
    %v1785 = vmul.f32 %v1781, 1.442695
    %v1786 = vpow.pop %v1785
    %v1787 = vmul.f32 %v1782, 1.442695
    %v1788 = vpow.pop %v1787
    %v1789 = vmul.f32 %v1783, 1.442695
    %v1790 = vpow.pop %v1789
    %v1791 = vmul.f32 %v1784, 1.442695
    %v1792 = vpow.pop %v1791
    %v1793 = vadd.f32 %v1786, 1.0
    %v1794 = vadd.f32 %v1788, 1.0
    %v1795 = vadd.f32 %v1790, 1.0
    %v1796 = vadd.f32 %v1792, 1.0
    %v1797 = vrcp.pop %v1793
    %v1798 = vmul.f32 1.0, %v1797
    %v1799 = vrcp.pop %v1794
    %v1800 = vmul.f32 1.0, %v1799
    %v1801 = vrcp.pop %v1795
    %v1802 = vmul.f32 1.0, %v1801
    %v1803 = vrcp.pop %v1796
    %v1804 = vmul.f32 1.0, %v1803
    %v1805 = vmul.f32 %v1800, 2.0
    %v1806 = vmul.f32 %v1804, 2.0
    %v1807 = vsub.f32 %v1805, 1.0
    %v1808 = vsub.f32 %v1806, 1.0
    %v1811 = vrot.slane %v1615, 7
    %v1812 = vrot.slane %v1616, 7
    %v1815 = vmul.f32 %v1798, %v1811
    %v1816 = vmul.f32 %v1802, %v1812
    %v1817 = vmul.f32 %v1798, %v1807
    %v1818 = vmul.f32 %v1802, %v1808
    %1821 = vrot.lane.b32.xlu0 %v1817, 64
    %v1822 = vpop.permute.xlu0 %1821
    %1823 = vrot.lane.b32.xlu0 %v1818, 64
    %v1824 = vpop.permute.xlu0 %1823
    %v1827 = vadd.f32 %v1815, %v1822
    %v1828 = vadd.f32 %v1816, %v1824
    %v1829 = vtanh.pop %v1827
    %v1830 = vtanh.pop %v1828
    %v1831 = vmul.f32 %v1800, %v1829
    %v1832 = vmul.f32 %v1804, %v1830
    %v1835 = vrot.slane %v1832, 7
    %1836 = vrot.lane.b32.xlu0 %v1831, 64
    %v1837 = vpop.permute.xlu0 %1836
    %1838 = vrot.lane.b32.xlu0 %v1835, 64
    %v1839 = vpop.permute.xlu0 %1838
    %v1843 = vrot.slane %v1700, 1
    %v1845 = vsel %vm194, %v1837, %v1843
    %v1846 = vsel %vm194, %v1839, %v1843
    %v1847 = vpack.c.bf16 %v1846, %v1845
    %v1849 = vshrl.u32 %v1847, 16
    %v1851 = vrot.slane %v1849, 3
    %v1852 = vshll.u32 %v1847, 16
    %v1854 = vrot.slane %v1852, 4
    %v1855 = vor.u32 %v1851, %v1854
    %1857 = vmatprep.subr.bf16.mxu0 %v287
    %1858 = vmatpush1.bf16.msra.mxu0 %v286
    %1859 = vmatprep.subr.bf16.mxu0 %v285
    %1860 = vmatpush1.bf16.msra.mxu0 %v284
    %1861 = vmatprep.subr.bf16.mxu0 %v283
    %1862 = vmatpush1.bf16.msra.mxu0 %v282
    %1863 = vmatprep.subr.bf16.mxu0 %v281
    %1864 = vmatpush1.bf16.msra.mxu0 %v280
    %1865 = vmatprep.subr.bf16.mxu0 %v279
    %1866 = vmatpush1.bf16.msra.mxu0 %v278
    %1867 = vmatprep.subr.bf16.mxu0 %v277
    %1868 = vmatpush1.bf16.msra.mxu0 %v276
    %1869 = vmatprep.subr.bf16.mxu0 %v275
    %1870 = vmatpush1.bf16.msra.mxu0 %v274
    %1871 = vmatprep.subr.bf16.mxu0 %v273
    %1872 = vmatpush1.bf16.msra.mxu0 %v272
    %1873 = vmatprep.subr.bf16.mxu0 0
    %1874 = vmatpush2.bf16.msra.mxu0 0
    %1875 = vmatprep.subr.bf16.mxu0 0
    %1876 = vmatpush2.bf16.msra.mxu0 0
    %1877 = vmatprep.subr.bf16.mxu0 0
    %1878 = vmatpush2.bf16.msra.mxu0 0
    %1879 = vmatprep.subr.bf16.mxu0 0
    %1880 = vmatpush2.bf16.msra.mxu0 0
    %1881 = vmatprep.subr.bf16.mxu0 0
    %1882 = vmatpush2.bf16.msra.mxu0 0
    %1883 = vmatprep.subr.bf16.mxu0 0
    %1884 = vmatpush2.bf16.msra.mxu0 0
    %1885 = vmatprep.subr.bf16.mxu0 0
    %1886 = vmatpush2.bf16.msra.mxu0 0
    %1887 = vmatprep.subr.bf16.mxu0 0
    %1888 = vmatpush2.bf16.msra.mxu0 0
    %1889 = vmatprep.mubr.bf16.mxu0 0
    %1890 = vmatmul.mubr.bf16.gmra.mxu0 %v1855
    %v1891 = vpop.f32.mrf.mxu0
    %v1892 = vadd.f32 %v217, %v1891
    %v1893 = vpop.f32.mrf.mxu0
    %v1894 = vadd.f32 %v221, %v1893
    %v1895 = vpop.f32.mrf.mxu0
    %v1896 = vpop.f32.mrf.mxu0
    %1897 = vdwg.mxu0
    %v1898 = vxor.u32 %v1892, 2147483648
    %v1899 = vxor.u32 %v1894, 2147483648
    %v1900 = vmul.f32 %v1898, 1.442695
    %v1901 = vpow.pop %v1900
    %v1902 = vmul.f32 %v1899, 1.442695
    %v1903 = vpow.pop %v1902
    %v1904 = vadd.f32 %v1901, 1.0
    %v1905 = vadd.f32 %v1903, 1.0
    %v1906 = vrcp.pop %v1904
    %v1907 = vmul.f32 1.0, %v1906
    %v1908 = vrcp.pop %v1905
    %v1909 = vmul.f32 1.0, %v1908
    %v1910 = vmul.f32 %v1909, 2.0
    %v1911 = vsub.f32 %v1910, 1.0
    %v1912 = vmul.f32 %v1907, %v1698
    %v1913 = vmul.f32 %v1907, %v1911
    %1915 = vrot.lane.b32.xlu0 %v1913, 64
    %v1916 = vpop.permute.xlu0 %1915
    %v1918 = vadd.f32 %v1912, %v1916
    %v1919 = vtanh.pop %v1918
    %v1920 = vmul.f32 %v1909, %v1919
    %v1921 = vlaneseq
    %v1922 = vshrl.u32 %v1921, 7
    %v1923 = vsub.s32 7, %v1922
    %v1924 = vrot.slane %v139, %v1923
    %1926 = vrot.lane.b32.xlu0 %v1924, 64
    %v1927 = vpop.permute.xlu0 %1926
    %v1929 = vmul.f32 %v1920, %v1927
    %v1930 = vadd.f32 %v1710, %v1929
    %1932 = vrot.lane.b32.xlu0 %v1930, 64
    %v1933 = vpop.permute.xlu0 %1932
    %vm1935 = vcmask 517120
    %v1936 = vsel %vm1935, %v1933, 0.0
    %1937 = vadd.xlane.f32.xlu0 %v1936
    %v1938 = vpop.xlane.xlu0 %1937
    %v1939 = vld [vmem:[#allocation2] sm:$0x1]
    %v1941 = vlaneseq
    %v1942 = vshrl.u32 %v1941, 7
    %v1943 = vsub.s32 0, %v1942
    %v1944 = vrot.slane %v1939, %v1943
    %v1946 = vadd.f32 %v1938, %v1944
    %vm1947 = vcmask 1024
    %1948 = vst.msk [vmem:[%s8] sm:$0x3] %vm1947, %v1946
    // Predicated region
    $region42: #{lstm_cnn_forward.1} parent=1 // pred_check
      _
    $region43: #{lstm_cnn_forward.1} parent=1 // pred_check_branch
      %1950 = sbr.rel (0) target = $region45
    $region44: #{lstm_cnn_forward.1} parent=1 // pred_region
      _
    $region45: #{lstm_cnn_forward.1} parent=1 // pred_fallthru
      _
    // Predicated region
    $region46: #{lstm_cnn_forward.1} parent=1 // pred_check
      _
    $region47: #{lstm_cnn_forward.1} parent=1 // pred_check_branch
      %1952 = sbr.rel (0) target = $region49
    $region48: #{lstm_cnn_forward.1} parent=1 // pred_region
      _
    $region49: #{lstm_cnn_forward.1} parent=1 // pred_fallthru
      _
    %1953 = vsyncpa [#allocation4], 1
    %1954 = vsyncpa [#allocation6], 1

</llo_original>
